<compile_context>
chip_gen: v7x
topology: tpu7x:2x2x1
jax: 0.10.0
libtpu: 0.0.40
codegen_flags: <defaults>
</compile_context>

<pallas_src>
import functools
import math

import jax
import jax.numpy as jnp
from jax.experimental import pallas as pl
from jax.experimental.pallas import tpu as pltpu

LN_EPS = 1e-12


# --------------------------------------------------------------------------- #
# In-kernel helpers
# --------------------------------------------------------------------------- #
def _layer_norm(x, gamma, beta):
    mean = jnp.mean(x, axis=-1, keepdims=True)
    var = jnp.mean((x - mean) ** 2, axis=-1, keepdims=True)
    return (x - mean) * jax.lax.rsqrt(var + LN_EPS) * gamma + beta


# --------------------------------------------------------------------------- #
# Single fused kernel: embeddings add + LN -> MHSA + res/LN -> MLP + res/LN
# Activations are a (B*S, H) slab; attention uses a (B*S, B*S) additive mask
# (key padding + cross-batch block) so all batches are handled in one pass.
# --------------------------------------------------------------------------- #
def protrans_kernel(words_ref, pos_ref, amask_ref, slab_ref, bb1_ref,
                    wqkv_ref, w1_ref, w2_ref, o_ref, *, num_head):
    BS, H = words_ref.shape
    d = H // num_head

    # Packed small params: rows = [eg, eb, bq*scale, bk, bv, g1, b1, bb2, g2, b2]
    eg, eb = slab_ref[0:1, :], slab_ref[1:2, :]
    bq, bk, bv = slab_ref[2:3, :], slab_ref[3:4, :], slab_ref[4:5, :]
    g1, b1 = slab_ref[5:6, :], slab_ref[6:7, :]
    bb2 = slab_ref[7:8, :]
    g2, b2 = slab_ref[8:9, :], slab_ref[9:10, :]

    # ---- Embeddings: word + position, LayerNorm --------------------------- #
    x = _layer_norm(words_ref[...] + pos_ref[...], eg, eb)          # (BS, H)

    # ---- Full-width Q/K/V projections (1/sqrt(d) folded into Wq/bq) ------- #
    q = jnp.dot(x, wqkv_ref[0], preferred_element_type=jnp.float32) + bq
    k = jnp.dot(x, wqkv_ref[1], preferred_element_type=jnp.float32) + bk
    v = jnp.dot(x, wqkv_ref[2], preferred_element_type=jnp.float32) + bv

    amask = amask_ref[...]                                          # (BS, BS)
    lane = jax.lax.broadcasted_iota(jnp.int32, (1, H), 1)

    c = jnp.zeros((BS, H), jnp.float32)
    for h in range(num_head):                    # static unroll over heads
        sel = (lane >= h * d) & (lane < (h + 1) * d)
        # Lane-masked Q contracts over full H == Q_h @ K_h^T exactly.
        qh = jnp.where(sel, q, 0.0)
        s = jax.lax.dot_general(qh, k, (((1,), (1,)), ((), ())),
                                preferred_element_type=jnp.float32)  # (BS, BS)
        s = s + amask                            # padding + cross-batch block
        s = s - jnp.max(s, axis=-1, keepdims=True)
        p = jnp.exp(s)
        p = p / jnp.sum(p, axis=-1, keepdims=True)   # exact softmax normalization
        # Head h owns lanes [h*d, (h+1)*d): accumulating p @ (lane-masked V)
        # assembles the concatenated multi-head context without any concat.
        vh = jnp.where(sel, v, 0.0)
        c = c + jnp.dot(p, vh, preferred_element_type=jnp.float32)

    # ---- Residual + LN + FFN + residual + LN ------------------------------- #
    h1 = _layer_norm(c + x, g1, b1)
    ff = jnp.maximum(
        jnp.dot(h1, w1_ref[...], preferred_element_type=jnp.float32) + bb1_ref[...],
        0.0)
    ff = jnp.dot(ff, w2_ref[...], preferred_element_type=jnp.float32) + bb2
    o_ref[...] = _layer_norm(ff + h1, g2, b2)


def fused_protrans(words_flat, pos_flat, amask, slab, bb1, wqkv, w1, w2, num_head):
    BS, H = words_flat.shape
    vmem = pl.BlockSpec(memory_space=pltpu.MemorySpace.VMEM)   # whole array in VMEM
    return pl.pallas_call(
        functools.partial(protrans_kernel, num_head=num_head),
        out_shape=jax.ShapeDtypeStruct((BS, H), jnp.float32),
        in_specs=[vmem] * 8,
        out_specs=vmem,
    )(words_flat, pos_flat, amask, slab, bb1, wqkv, w1, w2)


# --------------------------------------------------------------------------- #
# Parameter init (deterministic, synthetic).  Linear weights stored [in, out].
# --------------------------------------------------------------------------- #
def init_params(key, vocab_size, hidden_size, max_position_size,
                num_attn_layer, ffn_hidden_size):
    H, F = hidden_size, ffn_hidden_size
    keys = jax.random.split(key, 2 + num_attn_layer)
    params = {
        "word_emb": 0.02 * jax.random.normal(keys[0], (vocab_size + 1, H), jnp.float32),
        "pos_emb": 0.02 * jax.random.normal(keys[1], (max_position_size, H), jnp.float32),
        "emb_ln_g": jnp.ones((1, H), jnp.float32),
        "emb_ln_b": jnp.zeros((1, H), jnp.float32),
        "layers": [],
    }
    for i in range(num_attn_layer):
        lk = jax.random.split(keys[2 + i], 10)
        s_h = 1.0 / math.sqrt(H)
        s_f = 1.0 / math.sqrt(F)
        layer = {
            "wq": s_h * jax.random.normal(lk[0], (H, H), jnp.float32),
            "bq": s_h * jax.random.normal(lk[1], (1, H), jnp.float32),
            "wk": s_h * jax.random.normal(lk[2], (H, H), jnp.float32),
            "bk": s_h * jax.random.normal(lk[3], (1, H), jnp.float32),
            "wv": s_h * jax.random.normal(lk[4], (H, H), jnp.float32),
            "bv": s_h * jax.random.normal(lk[5], (1, H), jnp.float32),
            "g1": jnp.ones((1, H), jnp.float32),
            "b1": jnp.zeros((1, H), jnp.float32),
            "w1": s_h * jax.random.normal(lk[6], (H, F), jnp.float32),
            "bb1": s_h * jax.random.normal(lk[7], (1, F), jnp.float32),
            "w2": s_f * jax.random.normal(lk[8], (F, H), jnp.float32),
            "bb2": s_f * jax.random.normal(lk[9], (1, H), jnp.float32),
            "g2": jnp.ones((1, H), jnp.float32),
            "b2": jnp.zeros((1, H), jnp.float32),
        }
        params["layers"].append(layer)
    return params


# --------------------------------------------------------------------------- #
# ProTrans forward (lstm=False), jitted end-to-end
# --------------------------------------------------------------------------- #
@functools.partial(jax.jit, static_argnums=(3,))
def protrans_forward(params, protein, prot_mask, num_head):
    B, S = protein.shape
    H = params["word_emb"].shape[1]
    d = H // num_head
    scale = 1.0 / math.sqrt(d)

    # Embedding gather (glue) + batch folded into the sublane dim.
    words = jnp.take(params["word_emb"], protein, axis=0).reshape(B * S, H)
    pos = jnp.tile(params["pos_emb"][:S], (B, 1))                       # (B*S, H)

    # Additive attention mask (B*S, B*S): reference key-padding mask within a
    # batch, -1e9 across batches (exp underflows to exactly 0 -> per-batch softmax).
    key_mask = ((1.0 - prot_mask) * -10000.0).astype(jnp.float32)       # (B, S)
    same = jnp.arange(B)[:, None] == jnp.arange(B)[None, :]             # (B, B)
    amask = jnp.where(same[:, None, :, None], key_mask[None, None, :, :],
                      jnp.float32(-1e9))                                # (B,1,B,S)
    amask = jnp.broadcast_to(amask, (B, S, B, S)).reshape(B * S, B * S)

    # Faithful dead-code elimination: in the PyTorch loop every layer reads
    # prot_encode and `output` is overwritten, so only the last layer matters.
    last = params["layers"][-1]

    # Pack the 13 small rows into one slab; fold 1/sqrt(d) into the Q path.
    slab = jnp.concatenate([
        params["emb_ln_g"], params["emb_ln_b"],
        last["bq"] * scale, last["bk"], last["bv"],
        last["g1"], last["b1"], last["bb2"], last["g2"], last["b2"],
    ], axis=0)                                                          # (10, H)
    wqkv = jnp.stack([last["wq"] * scale, last["wk"], last["wv"]], axis=0)

    out = fused_protrans(words, pos, amask, slab, last["bb1"], wqkv,
                         last["w1"], last["w2"], num_head)
    return out.reshape(B, S, H)


# --------------------------------------------------------------------------- #
# Pure-JAX reference (verification only)
# --------------------------------------------------------------------------- #
def ref_forward(params, protein, prot_mask, num_head):
    B, S = protein.shape
    H = params["word_emb"].shape[1]
    d = H // num_head
    x = jnp.take(params["word_emb"], protein, axis=0) + params["pos_emb"][:S][None]
    x = _layer_norm(x, params["emb_ln_g"][0], params["emb_ln_b"][0])
    mask4 = ((1.0 - prot_mask) * -10000.0)[:, None, None, :]            # (B,1,1,S)

    def enc(xin, p):
        q = (xin @ p["wq"] + p["bq"][0]).reshape(B, S, num_head, d).transpose(0, 2, 1, 3)
        k = (xin @ p["wk"] + p["bk"][0]).reshape(B, S, num_head, d).transpose(0, 2, 1, 3)
        v = (xin @ p["wv"] + p["bv"][0]).reshape(B, S, num_head, d).transpose(0, 2, 1, 3)
        s = jnp.einsum("bhqd,bhkd->bhqk", q, k) / math.sqrt(d) + mask4
        a = jax.nn.softmax(s, axis=-1)
        c = jnp.einsum("bhqk,bhkd->bhqd", a, v).transpose(0, 2, 1, 3).reshape(B, S, H)
        h1 = _layer_norm(c + xin, p["g1"][0], p["b1"][0])
        ff = jax.nn.relu(h1 @ p["w1"] + p["bb1"][0]) @ p["w2"] + p["bb2"][0]
        return _layer_norm(ff + h1, p["g2"][0], p["b2"][0])

    out = None
    for p in params["layers"]:                   # same loop as PyTorch reference
        out = enc(x, p)
    return out


# --------------------------------------------------------------------------- #
if __name__ == "__main__":
    # Model config (small, consistent with the module's constructor args)
    vocab_size = 20
    hidden_size = 32
    max_position_size = 64
    num_attn_layer = 2
    num_attn_heads = 4
    ffn_hidden_size = 64
    # lstm=False, dropout -> identity at inference

    B, S = 2, 8

    key = jax.random.PRNGKey(0)
    k_tok, _ = jax.random.split(key)
    protein = jax.random.randint(k_tok, (B, S), 0, vocab_size + 1, dtype=jnp.int32)
    prot_mask = jnp.ones((B, S), jnp.float32).at[1, 6:].set(0.0)

    params = init_params(jax.random.PRNGKey(1234), vocab_size, hidden_size,
                         max_position_size, num_attn_layer, ffn_hidden_size)

    out = jax.block_until_ready(
        protrans_forward(params, protein, prot_mask, num_attn_heads))

    # Reference at HIGHEST matmul precision so both sides are ~f32-accurate
    # (the kernel's f32 dots are multi-pass on the MXU; expected agreement ~1e-5).
    with jax.default_matmul_precision("highest"):
        ref = jax.block_until_ready(
            ref_forward(params, protein, prot_mask, num_attn_heads))

    assert out.shape == (B, S, hidden_size)
    err = jnp.max(jnp.abs(out - ref))
    # Headroom retained for MXU pass-count / generation differences.
    assert jnp.allclose(out, ref, rtol=2e-3, atol=2e-3), f"max abs err {err}"

    print("KERNEL_OK")
</pallas_src>

<mosaic_0001>
module attributes {stable_mosaic.version = 11 : i64} {
  func.func @protrans_kernel(%arg0: memref<16x32xf32, #tpu.memory_space<vmem>>, %arg1: memref<16x32xf32, #tpu.memory_space<vmem>>, %arg2: memref<16x16xf32, #tpu.memory_space<vmem>>, %arg3: memref<10x32xf32, #tpu.memory_space<vmem>>, %arg4: memref<1x64xf32, #tpu.memory_space<vmem>>, %arg5: memref<3x32x32xf32, #tpu.memory_space<vmem>>, %arg6: memref<32x64xf32, #tpu.memory_space<vmem>>, %arg7: memref<64x32xf32, #tpu.memory_space<vmem>>, %arg8: memref<16x32xf32, #tpu.memory_space<vmem>>) attributes {dimension_semantics = [], scalar_prefetch = 0 : i64, scratch_operands = 0 : i64, tpu.core_type = #tpu.core_type<tc>} {
    %c0 = arith.constant 0 : index
    %c0_0 = arith.constant 0 : index
    %0 = vector.load %arg3[%c0, %c0_0] : memref<10x32xf32, #tpu.memory_space<vmem>>, vector<1x32xf32>
    %c1 = arith.constant 1 : index
    %c0_1 = arith.constant 0 : index
    %1 = vector.load %arg3[%c1, %c0_1] : memref<10x32xf32, #tpu.memory_space<vmem>>, vector<1x32xf32>
    %c2 = arith.constant 2 : index
    %c0_2 = arith.constant 0 : index
    %2 = vector.load %arg3[%c2, %c0_2] : memref<10x32xf32, #tpu.memory_space<vmem>>, vector<1x32xf32>
    %c3 = arith.constant 3 : index
    %c0_3 = arith.constant 0 : index
    %3 = vector.load %arg3[%c3, %c0_3] : memref<10x32xf32, #tpu.memory_space<vmem>>, vector<1x32xf32>
    %c4 = arith.constant 4 : index
    %c0_4 = arith.constant 0 : index
    %4 = vector.load %arg3[%c4, %c0_4] : memref<10x32xf32, #tpu.memory_space<vmem>>, vector<1x32xf32>
    %c5 = arith.constant 5 : index
    %c0_5 = arith.constant 0 : index
    %5 = vector.load %arg3[%c5, %c0_5] : memref<10x32xf32, #tpu.memory_space<vmem>>, vector<1x32xf32>
    %c6 = arith.constant 6 : index
    %c0_6 = arith.constant 0 : index
    %6 = vector.load %arg3[%c6, %c0_6] : memref<10x32xf32, #tpu.memory_space<vmem>>, vector<1x32xf32>
    %c7 = arith.constant 7 : index
    %c0_7 = arith.constant 0 : index
    %7 = vector.load %arg3[%c7, %c0_7] : memref<10x32xf32, #tpu.memory_space<vmem>>, vector<1x32xf32>
    %c8 = arith.constant 8 : index
    %c0_8 = arith.constant 0 : index
    %8 = vector.load %arg3[%c8, %c0_8] : memref<10x32xf32, #tpu.memory_space<vmem>>, vector<1x32xf32>
    %c9 = arith.constant 9 : index
    %c0_9 = arith.constant 0 : index
    %9 = vector.load %arg3[%c9, %c0_9] : memref<10x32xf32, #tpu.memory_space<vmem>>, vector<1x32xf32>
    %c0_10 = arith.constant 0 : index
    %c0_11 = arith.constant 0 : index
    %10 = vector.load %arg0[%c0_10, %c0_11] : memref<16x32xf32, #tpu.memory_space<vmem>>, vector<16x32xf32>
    %c0_12 = arith.constant 0 : index
    %c0_13 = arith.constant 0 : index
    %11 = vector.load %arg1[%c0_12, %c0_13] : memref<16x32xf32, #tpu.memory_space<vmem>>, vector<16x32xf32>
    %12 = arith.addf %10, %11 : vector<16x32xf32>
    %cst = arith.constant dense<0.000000e+00> : vector<16xf32>
    %13 = vector.multi_reduction <add>, %12, %cst [1] : vector<16x32xf32> to vector<16xf32>
    %14 = vector.shape_cast %13 : vector<16xf32> to vector<16x1xf32>
    %cst_14 = arith.constant 3.200000e+01 : f32
    %15 = vector.broadcast %cst_14 : f32 to vector<16x1xf32>
    %16 = arith.divf %14, %15 : vector<16x1xf32>
    %17 = vector.broadcast %16 : vector<16x1xf32> to vector<16x32xf32>
    %18 = arith.subf %12, %17 : vector<16x32xf32>
    %19 = arith.mulf %18, %18 : vector<16x32xf32>
    %cst_15 = arith.constant dense<0.000000e+00> : vector<16xf32>
    %20 = vector.multi_reduction <add>, %19, %cst_15 [1] : vector<16x32xf32> to vector<16xf32>
    %21 = vector.shape_cast %20 : vector<16xf32> to vector<16x1xf32>
    %cst_16 = arith.constant 3.200000e+01 : f32
    %22 = vector.broadcast %cst_16 : f32 to vector<16x1xf32>
    %23 = arith.divf %21, %22 : vector<16x1xf32>
    %24 = vector.broadcast %16 : vector<16x1xf32> to vector<16x32xf32>
    %25 = arith.subf %12, %24 : vector<16x32xf32>
    %cst_17 = arith.constant 9.99999996E-13 : f32
    %26 = vector.broadcast %cst_17 : f32 to vector<16x1xf32>
    %27 = arith.addf %23, %26 : vector<16x1xf32>
    %28 = math.rsqrt %27 : vector<16x1xf32>
    %29 = vector.broadcast %28 : vector<16x1xf32> to vector<16x32xf32>
    %30 = arith.mulf %25, %29 : vector<16x32xf32>
    %31 = vector.broadcast %0 : vector<1x32xf32> to vector<16x32xf32>
    %32 = arith.mulf %30, %31 : vector<16x32xf32>
    %33 = vector.broadcast %1 : vector<1x32xf32> to vector<16x32xf32>
    %34 = arith.addf %32, %33 : vector<16x32xf32>
    %c0_18 = arith.constant 0 : index
    %c0_19 = arith.constant 0 : index
    %c0_20 = arith.constant 0 : index
    %35 = vector.load %arg5[%c0_18, %c0_19, %c0_20] : memref<3x32x32xf32, #tpu.memory_space<vmem>>, vector<1x32x32xf32>
    %36 = vector.shape_cast %35 : vector<1x32x32xf32> to vector<32x32xf32>
    %cst_21 = arith.constant dense<0.000000e+00> : vector<16x32xf32>
    %37 = tpu.matmul %34, %36, %cst_21 {dimension_numbers = #tpu.dot_dimension_numbers<[1], [0], [0], [1], [0, 0, 1, 1], [], []>} : vector<16x32xf32>, vector<32x32xf32>, vector<16x32xf32> -> vector<16x32xf32>
    %38 = vector.broadcast %2 : vector<1x32xf32> to vector<16x32xf32>
    %39 = arith.addf %37, %38 : vector<16x32xf32>
    %c1_22 = arith.constant 1 : index
    %c0_23 = arith.constant 0 : index
    %c0_24 = arith.constant 0 : index
    %40 = vector.load %arg5[%c1_22, %c0_23, %c0_24] : memref<3x32x32xf32, #tpu.memory_space<vmem>>, vector<1x32x32xf32>
    %41 = vector.shape_cast %40 : vector<1x32x32xf32> to vector<32x32xf32>
    %cst_25 = arith.constant dense<0.000000e+00> : vector<16x32xf32>
    %42 = tpu.matmul %34, %41, %cst_25 {dimension_numbers = #tpu.dot_dimension_numbers<[1], [0], [0], [1], [0, 0, 1, 1], [], []>} : vector<16x32xf32>, vector<32x32xf32>, vector<16x32xf32> -> vector<16x32xf32>
    %43 = vector.broadcast %3 : vector<1x32xf32> to vector<16x32xf32>
    %44 = arith.addf %42, %43 : vector<16x32xf32>
    %c2_26 = arith.constant 2 : index
    %c0_27 = arith.constant 0 : index
    %c0_28 = arith.constant 0 : index
    %45 = vector.load %arg5[%c2_26, %c0_27, %c0_28] : memref<3x32x32xf32, #tpu.memory_space<vmem>>, vector<1x32x32xf32>
    %46 = vector.shape_cast %45 : vector<1x32x32xf32> to vector<32x32xf32>
    %cst_29 = arith.constant dense<0.000000e+00> : vector<16x32xf32>
    %47 = tpu.matmul %34, %46, %cst_29 {dimension_numbers = #tpu.dot_dimension_numbers<[1], [0], [0], [1], [0, 0, 1, 1], [], []>} : vector<16x32xf32>, vector<32x32xf32>, vector<16x32xf32> -> vector<16x32xf32>
    %48 = vector.broadcast %4 : vector<1x32xf32> to vector<16x32xf32>
    %49 = arith.addf %47, %48 : vector<16x32xf32>
    %c0_30 = arith.constant 0 : index
    %c0_31 = arith.constant 0 : index
    %50 = vector.load %arg2[%c0_30, %c0_31] : memref<16x16xf32, #tpu.memory_space<vmem>>, vector<16x16xf32>
    %51 = tpu.iota {dimensions = array<i32: 1>} : vector<1x32xi32>
    %cst_32 = arith.constant 0.000000e+00 : f32
    %52 = vector.broadcast %cst_32 : f32 to vector<16x32xf32>
    %c0_i32 = arith.constant 0 : i32
    %53 = vector.broadcast %c0_i32 : i32 to vector<1x32xi32>
    %54 = arith.cmpi sge, %51, %53 : vector<1x32xi32>
    %c8_i32 = arith.constant 8 : i32
    %55 = vector.broadcast %c8_i32 : i32 to vector<1x32xi32>
    %56 = arith.cmpi slt, %51, %55 : vector<1x32xi32>
    %57 = arith.andi %54, %56 : vector<1x32xi1>
    %cst_33 = arith.constant 0.000000e+00 : f32
    %58 = vector.shape_cast %57 : vector<1x32xi1> to vector<1x32xi1>
    %59 = vector.broadcast %58 : vector<1x32xi1> to vector<16x32xi1>
    %60 = vector.broadcast %cst_33 : f32 to vector<16x32xf32>
    %61 = arith.select %59, %39, %60 : vector<16x32xi1>, vector<16x32xf32>
    %cst_34 = arith.constant dense<0.000000e+00> : vector<16x16xf32>
    %62 = tpu.matmul %61, %44, %cst_34 {dimension_numbers = #tpu.dot_dimension_numbers<[1], [1], [0], [0], [0, 0, 1, 0], [], []>} : vector<16x32xf32>, vector<16x32xf32>, vector<16x16xf32> -> vector<16x16xf32>
    %63 = arith.addf %62, %50 : vector<16x16xf32>
    %cst_35 = arith.constant dense<0xFF800000> : vector<16xf32>
    %64 = vector.multi_reduction <maximumf>, %63, %cst_35 [1] : vector<16x16xf32> to vector<16xf32>
    %65 = vector.shape_cast %64 : vector<16xf32> to vector<16x1xf32>
    %66 = vector.broadcast %65 : vector<16x1xf32> to vector<16x16xf32>
    %67 = arith.subf %63, %66 : vector<16x16xf32>
    %68 = math.exp %67 : vector<16x16xf32>
    %cst_36 = arith.constant dense<0.000000e+00> : vector<16xf32>
    %69 = vector.multi_reduction <add>, %68, %cst_36 [1] : vector<16x16xf32> to vector<16xf32>
    %70 = vector.shape_cast %69 : vector<16xf32> to vector<16x1xf32>
    %71 = vector.broadcast %70 : vector<16x1xf32> to vector<16x16xf32>
    %72 = arith.divf %68, %71 : vector<16x16xf32>
    %cst_37 = arith.constant 0.000000e+00 : f32
    %73 = vector.shape_cast %57 : vector<1x32xi1> to vector<1x32xi1>
    %74 = vector.broadcast %73 : vector<1x32xi1> to vector<16x32xi1>
    %75 = vector.broadcast %cst_37 : f32 to vector<16x32xf32>
    %76 = arith.select %74, %49, %75 : vector<16x32xi1>, vector<16x32xf32>
    %cst_38 = arith.constant dense<0.000000e+00> : vector<16x32xf32>
    %77 = tpu.matmul %72, %76, %cst_38 {dimension_numbers = #tpu.dot_dimension_numbers<[1], [0], [0], [1], [0, 0, 1, 1], [], []>} : vector<16x16xf32>, vector<16x32xf32>, vector<16x32xf32> -> vector<16x32xf32>
    %78 = arith.addf %52, %77 : vector<16x32xf32>
    %c8_i32_39 = arith.constant 8 : i32
    %79 = vector.broadcast %c8_i32_39 : i32 to vector<1x32xi32>
    %80 = arith.cmpi sge, %51, %79 : vector<1x32xi32>
    %c16_i32 = arith.constant 16 : i32
    %81 = vector.broadcast %c16_i32 : i32 to vector<1x32xi32>
    %82 = arith.cmpi slt, %51, %81 : vector<1x32xi32>
    %83 = arith.andi %80, %82 : vector<1x32xi1>
    %cst_40 = arith.constant 0.000000e+00 : f32
    %84 = vector.shape_cast %83 : vector<1x32xi1> to vector<1x32xi1>
    %85 = vector.broadcast %84 : vector<1x32xi1> to vector<16x32xi1>
    %86 = vector.broadcast %cst_40 : f32 to vector<16x32xf32>
    %87 = arith.select %85, %39, %86 : vector<16x32xi1>, vector<16x32xf32>
    %cst_41 = arith.constant dense<0.000000e+00> : vector<16x16xf32>
    %88 = tpu.matmul %87, %44, %cst_41 {dimension_numbers = #tpu.dot_dimension_numbers<[1], [1], [0], [0], [0, 0, 1, 0], [], []>} : vector<16x32xf32>, vector<16x32xf32>, vector<16x16xf32> -> vector<16x16xf32>
    %89 = arith.addf %88, %50 : vector<16x16xf32>
    %cst_42 = arith.constant dense<0xFF800000> : vector<16xf32>
    %90 = vector.multi_reduction <maximumf>, %89, %cst_42 [1] : vector<16x16xf32> to vector<16xf32>
    %91 = vector.shape_cast %90 : vector<16xf32> to vector<16x1xf32>
    %92 = vector.broadcast %91 : vector<16x1xf32> to vector<16x16xf32>
    %93 = arith.subf %89, %92 : vector<16x16xf32>
    %94 = math.exp %93 : vector<16x16xf32>
    %cst_43 = arith.constant dense<0.000000e+00> : vector<16xf32>
    %95 = vector.multi_reduction <add>, %94, %cst_43 [1] : vector<16x16xf32> to vector<16xf32>
    %96 = vector.shape_cast %95 : vector<16xf32> to vector<16x1xf32>
    %97 = vector.broadcast %96 : vector<16x1xf32> to vector<16x16xf32>
    %98 = arith.divf %94, %97 : vector<16x16xf32>
    %cst_44 = arith.constant 0.000000e+00 : f32
    %99 = vector.shape_cast %83 : vector<1x32xi1> to vector<1x32xi1>
    %100 = vector.broadcast %99 : vector<1x32xi1> to vector<16x32xi1>
    %101 = vector.broadcast %cst_44 : f32 to vector<16x32xf32>
    %102 = arith.select %100, %49, %101 : vector<16x32xi1>, vector<16x32xf32>
    %cst_45 = arith.constant dense<0.000000e+00> : vector<16x32xf32>
    %103 = tpu.matmul %98, %102, %cst_45 {dimension_numbers = #tpu.dot_dimension_numbers<[1], [0], [0], [1], [0, 0, 1, 1], [], []>} : vector<16x16xf32>, vector<16x32xf32>, vector<16x32xf32> -> vector<16x32xf32>
    %104 = arith.addf %78, %103 : vector<16x32xf32>
    %c16_i32_46 = arith.constant 16 : i32
    %105 = vector.broadcast %c16_i32_46 : i32 to vector<1x32xi32>
    %106 = arith.cmpi sge, %51, %105 : vector<1x32xi32>
    %c24_i32 = arith.constant 24 : i32
    %107 = vector.broadcast %c24_i32 : i32 to vector<1x32xi32>
    %108 = arith.cmpi slt, %51, %107 : vector<1x32xi32>
    %109 = arith.andi %106, %108 : vector<1x32xi1>
    %cst_47 = arith.constant 0.000000e+00 : f32
    %110 = vector.shape_cast %109 : vector<1x32xi1> to vector<1x32xi1>
    %111 = vector.broadcast %110 : vector<1x32xi1> to vector<16x32xi1>
    %112 = vector.broadcast %cst_47 : f32 to vector<16x32xf32>
    %113 = arith.select %111, %39, %112 : vector<16x32xi1>, vector<16x32xf32>
    %cst_48 = arith.constant dense<0.000000e+00> : vector<16x16xf32>
    %114 = tpu.matmul %113, %44, %cst_48 {dimension_numbers = #tpu.dot_dimension_numbers<[1], [1], [0], [0], [0, 0, 1, 0], [], []>} : vector<16x32xf32>, vector<16x32xf32>, vector<16x16xf32> -> vector<16x16xf32>
    %115 = arith.addf %114, %50 : vector<16x16xf32>
    %cst_49 = arith.constant dense<0xFF800000> : vector<16xf32>
    %116 = vector.multi_reduction <maximumf>, %115, %cst_49 [1] : vector<16x16xf32> to vector<16xf32>
    %117 = vector.shape_cast %116 : vector<16xf32> to vector<16x1xf32>
    %118 = vector.broadcast %117 : vector<16x1xf32> to vector<16x16xf32>
    %119 = arith.subf %115, %118 : vector<16x16xf32>
    %120 = math.exp %119 : vector<16x16xf32>
    %cst_50 = arith.constant dense<0.000000e+00> : vector<16xf32>
    %121 = vector.multi_reduction <add>, %120, %cst_50 [1] : vector<16x16xf32> to vector<16xf32>
    %122 = vector.shape_cast %121 : vector<16xf32> to vector<16x1xf32>
    %123 = vector.broadcast %122 : vector<16x1xf32> to vector<16x16xf32>
    %124 = arith.divf %120, %123 : vector<16x16xf32>
    %cst_51 = arith.constant 0.000000e+00 : f32
    %125 = vector.shape_cast %109 : vector<1x32xi1> to vector<1x32xi1>
    %126 = vector.broadcast %125 : vector<1x32xi1> to vector<16x32xi1>
    %127 = vector.broadcast %cst_51 : f32 to vector<16x32xf32>
    %128 = arith.select %126, %49, %127 : vector<16x32xi1>, vector<16x32xf32>
    %cst_52 = arith.constant dense<0.000000e+00> : vector<16x32xf32>
    %129 = tpu.matmul %124, %128, %cst_52 {dimension_numbers = #tpu.dot_dimension_numbers<[1], [0], [0], [1], [0, 0, 1, 1], [], []>} : vector<16x16xf32>, vector<16x32xf32>, vector<16x32xf32> -> vector<16x32xf32>
    %130 = arith.addf %104, %129 : vector<16x32xf32>
    %c24_i32_53 = arith.constant 24 : i32
    %131 = vector.broadcast %c24_i32_53 : i32 to vector<1x32xi32>
    %132 = arith.cmpi sge, %51, %131 : vector<1x32xi32>
    %c32_i32 = arith.constant 32 : i32
    %133 = vector.broadcast %c32_i32 : i32 to vector<1x32xi32>
    %134 = arith.cmpi slt, %51, %133 : vector<1x32xi32>
    %135 = arith.andi %132, %134 : vector<1x32xi1>
    %cst_54 = arith.constant 0.000000e+00 : f32
    %136 = vector.shape_cast %135 : vector<1x32xi1> to vector<1x32xi1>
    %137 = vector.broadcast %136 : vector<1x32xi1> to vector<16x32xi1>
    %138 = vector.broadcast %cst_54 : f32 to vector<16x32xf32>
    %139 = arith.select %137, %39, %138 : vector<16x32xi1>, vector<16x32xf32>
    %cst_55 = arith.constant dense<0.000000e+00> : vector<16x16xf32>
    %140 = tpu.matmul %139, %44, %cst_55 {dimension_numbers = #tpu.dot_dimension_numbers<[1], [1], [0], [0], [0, 0, 1, 0], [], []>} : vector<16x32xf32>, vector<16x32xf32>, vector<16x16xf32> -> vector<16x16xf32>
    %141 = arith.addf %140, %50 : vector<16x16xf32>
    %cst_56 = arith.constant dense<0xFF800000> : vector<16xf32>
    %142 = vector.multi_reduction <maximumf>, %141, %cst_56 [1] : vector<16x16xf32> to vector<16xf32>
    %143 = vector.shape_cast %142 : vector<16xf32> to vector<16x1xf32>
    %144 = vector.broadcast %143 : vector<16x1xf32> to vector<16x16xf32>
    %145 = arith.subf %141, %144 : vector<16x16xf32>
    %146 = math.exp %145 : vector<16x16xf32>
    %cst_57 = arith.constant dense<0.000000e+00> : vector<16xf32>
    %147 = vector.multi_reduction <add>, %146, %cst_57 [1] : vector<16x16xf32> to vector<16xf32>
    %148 = vector.shape_cast %147 : vector<16xf32> to vector<16x1xf32>
    %149 = vector.broadcast %148 : vector<16x1xf32> to vector<16x16xf32>
    %150 = arith.divf %146, %149 : vector<16x16xf32>
    %cst_58 = arith.constant 0.000000e+00 : f32
    %151 = vector.shape_cast %135 : vector<1x32xi1> to vector<1x32xi1>
    %152 = vector.broadcast %151 : vector<1x32xi1> to vector<16x32xi1>
    %153 = vector.broadcast %cst_58 : f32 to vector<16x32xf32>
    %154 = arith.select %152, %49, %153 : vector<16x32xi1>, vector<16x32xf32>
    %cst_59 = arith.constant dense<0.000000e+00> : vector<16x32xf32>
    %155 = tpu.matmul %150, %154, %cst_59 {dimension_numbers = #tpu.dot_dimension_numbers<[1], [0], [0], [1], [0, 0, 1, 1], [], []>} : vector<16x16xf32>, vector<16x32xf32>, vector<16x32xf32> -> vector<16x32xf32>
    %156 = arith.addf %130, %155 : vector<16x32xf32>
    %157 = arith.addf %156, %34 : vector<16x32xf32>
    %cst_60 = arith.constant dense<0.000000e+00> : vector<16xf32>
    %158 = vector.multi_reduction <add>, %157, %cst_60 [1] : vector<16x32xf32> to vector<16xf32>
    %159 = vector.shape_cast %158 : vector<16xf32> to vector<16x1xf32>
    %cst_61 = arith.constant 3.200000e+01 : f32
    %160 = vector.broadcast %cst_61 : f32 to vector<16x1xf32>
    %161 = arith.divf %159, %160 : vector<16x1xf32>
    %162 = vector.broadcast %161 : vector<16x1xf32> to vector<16x32xf32>
    %163 = arith.subf %157, %162 : vector<16x32xf32>
    %164 = arith.mulf %163, %163 : vector<16x32xf32>
    %cst_62 = arith.constant dense<0.000000e+00> : vector<16xf32>
    %165 = vector.multi_reduction <add>, %164, %cst_62 [1] : vector<16x32xf32> to vector<16xf32>
    %166 = vector.shape_cast %165 : vector<16xf32> to vector<16x1xf32>
    %cst_63 = arith.constant 3.200000e+01 : f32
    %167 = vector.broadcast %cst_63 : f32 to vector<16x1xf32>
    %168 = arith.divf %166, %167 : vector<16x1xf32>
    %169 = vector.broadcast %161 : vector<16x1xf32> to vector<16x32xf32>
    %170 = arith.subf %157, %169 : vector<16x32xf32>
    %cst_64 = arith.constant 9.99999996E-13 : f32
    %171 = vector.broadcast %cst_64 : f32 to vector<16x1xf32>
    %172 = arith.addf %168, %171 : vector<16x1xf32>
    %173 = math.rsqrt %172 : vector<16x1xf32>
    %174 = vector.broadcast %173 : vector<16x1xf32> to vector<16x32xf32>
    %175 = arith.mulf %170, %174 : vector<16x32xf32>
    %176 = vector.broadcast %5 : vector<1x32xf32> to vector<16x32xf32>
    %177 = arith.mulf %175, %176 : vector<16x32xf32>
    %178 = vector.broadcast %6 : vector<1x32xf32> to vector<16x32xf32>
    %179 = arith.addf %177, %178 : vector<16x32xf32>
    %c0_65 = arith.constant 0 : index
    %c0_66 = arith.constant 0 : index
    %180 = vector.load %arg6[%c0_65, %c0_66] : memref<32x64xf32, #tpu.memory_space<vmem>>, vector<32x64xf32>
    %cst_67 = arith.constant dense<0.000000e+00> : vector<16x64xf32>
    %181 = tpu.matmul %179, %180, %cst_67 {dimension_numbers = #tpu.dot_dimension_numbers<[1], [0], [0], [1], [0, 0, 1, 1], [], []>} : vector<16x32xf32>, vector<32x64xf32>, vector<16x64xf32> -> vector<16x64xf32>
    %c0_68 = arith.constant 0 : index
    %c0_69 = arith.constant 0 : index
    %182 = vector.load %arg4[%c0_68, %c0_69] : memref<1x64xf32, #tpu.memory_space<vmem>>, vector<1x64xf32>
    %183 = vector.broadcast %182 : vector<1x64xf32> to vector<16x64xf32>
    %184 = arith.addf %181, %183 : vector<16x64xf32>
    %cst_70 = arith.constant 0.000000e+00 : f32
    %185 = vector.broadcast %cst_70 : f32 to vector<16x64xf32>
    %186 = arith.maximumf %184, %185 : vector<16x64xf32>
    %c0_71 = arith.constant 0 : index
    %c0_72 = arith.constant 0 : index
    %187 = vector.load %arg7[%c0_71, %c0_72] : memref<64x32xf32, #tpu.memory_space<vmem>>, vector<64x32xf32>
    %cst_73 = arith.constant dense<0.000000e+00> : vector<16x32xf32>
    %188 = tpu.matmul %186, %187, %cst_73 {dimension_numbers = #tpu.dot_dimension_numbers<[1], [0], [0], [1], [0, 0, 1, 1], [], []>} : vector<16x64xf32>, vector<64x32xf32>, vector<16x32xf32> -> vector<16x32xf32>
    %189 = vector.broadcast %7 : vector<1x32xf32> to vector<16x32xf32>
    %190 = arith.addf %188, %189 : vector<16x32xf32>
    %191 = arith.addf %190, %179 : vector<16x32xf32>
    %cst_74 = arith.constant dense<0.000000e+00> : vector<16xf32>
    %192 = vector.multi_reduction <add>, %191, %cst_74 [1] : vector<16x32xf32> to vector<16xf32>
    %193 = vector.shape_cast %192 : vector<16xf32> to vector<16x1xf32>
    %cst_75 = arith.constant 3.200000e+01 : f32
    %194 = vector.broadcast %cst_75 : f32 to vector<16x1xf32>
    %195 = arith.divf %193, %194 : vector<16x1xf32>
    %196 = vector.broadcast %195 : vector<16x1xf32> to vector<16x32xf32>
    %197 = arith.subf %191, %196 : vector<16x32xf32>
    %198 = arith.mulf %197, %197 : vector<16x32xf32>
    %cst_76 = arith.constant dense<0.000000e+00> : vector<16xf32>
    %199 = vector.multi_reduction <add>, %198, %cst_76 [1] : vector<16x32xf32> to vector<16xf32>
    %200 = vector.shape_cast %199 : vector<16xf32> to vector<16x1xf32>
    %cst_77 = arith.constant 3.200000e+01 : f32
    %201 = vector.broadcast %cst_77 : f32 to vector<16x1xf32>
    %202 = arith.divf %200, %201 : vector<16x1xf32>
    %203 = vector.broadcast %195 : vector<16x1xf32> to vector<16x32xf32>
    %204 = arith.subf %191, %203 : vector<16x32xf32>
    %cst_78 = arith.constant 9.99999996E-13 : f32
    %205 = vector.broadcast %cst_78 : f32 to vector<16x1xf32>
    %206 = arith.addf %202, %205 : vector<16x1xf32>
    %207 = math.rsqrt %206 : vector<16x1xf32>
    %208 = vector.broadcast %207 : vector<16x1xf32> to vector<16x32xf32>
    %209 = arith.mulf %204, %208 : vector<16x32xf32>
    %210 = vector.broadcast %8 : vector<1x32xf32> to vector<16x32xf32>
    %211 = arith.mulf %209, %210 : vector<16x32xf32>
    %212 = vector.broadcast %9 : vector<1x32xf32> to vector<16x32xf32>
    %213 = arith.addf %211, %212 : vector<16x32xf32>
    %c0_79 = arith.constant 0 : index
    %c0_80 = arith.constant 0 : index
    %214 = vector.load %arg8[%c0_79, %c0_80] : memref<16x32xf32, #tpu.memory_space<vmem>>, vector<16x32xf32>
    tpu.vector_store %arg8[%c0_79, %c0_80], %213 {strides = array<i32>} : memref<16x32xf32, #tpu.memory_space<vmem>>, vector<16x32xf32>,
    return
  }
}

</mosaic_0001>

<llo_original>
// kernel: protrans_forward.1
$region0: #{protrans_forward.1}
  #allocation0 [shape = 'u32[]', space=smem, size = 0x4, offset = 0x4, fixed_abs, tag = 'smem constant byte address 0x4 - core index']
  #allocation1 [shape = 'u32[144,128]{1,0:T(1,128)}', space=vmem, size = 0x12000, scoped, tag = 'internal scratch']
  %s0 = inlined_call_operand.vmem [shape: f32[16,32], index: 0, kind: input, shape index: {}]
  %s1 = inlined_call_operand.vmem [shape: f32[16,32], index: 1, kind: input, shape index: {}]
  %s2 = inlined_call_operand.vmem [shape: f32[16,16], index: 2, kind: input, shape index: {}]
  %s3 = inlined_call_operand.vmem [shape: f32[10,32], index: 3, kind: input, shape index: {}]
  %s4 = inlined_call_operand.vmem [shape: f32[1,64], index: 4, kind: input, shape index: {}]
  %s5 = inlined_call_operand.vmem [shape: f32[3,32,32], index: 5, kind: input, shape index: {}]
  %s6 = inlined_call_operand.vmem [shape: f32[32,64], index: 6, kind: input, shape index: {}]
  %s7 = inlined_call_operand.vmem [shape: f32[64,32], index: 7, kind: input, shape index: {}]
  %s8 = inlined_call_operand.hbm [shape: f32[16,32], index: 8, kind: output, shape index: {}]
  %s9 = sld [smem:[#allocation0]]
  $region42: #{protrans_forward.1} parent=0
    _
  %s11 = ssub.s32 1, %s9
  %s12 = scalar_select 0, %s11, %s9
  $region1: #{protrans_forward.1} parent=0
    #allocation2 [shape = 'u8[8192]{0}', space=vmem, size = 0x2000, scoped, tag = 'output window, operand 0, single buffered']
    #allocation3 [shape = 's32[1]{0}', space=sflag, size = 0x4, scoped, tag = 'scoped memory for protrans_forward.1']
    %13 = vsyncpa [#allocation3], 0
    // Predicated region
    $region2: #{protrans_forward.1} parent=1 // pred_check
      _
    $region3: #{protrans_forward.1} parent=1 // pred_check_branch
      %15 = sbr.rel (0) target = $region5
    $region4: #{protrans_forward.1} parent=1 // pred_region
      _
    $region5: #{protrans_forward.1} parent=1 // pred_fallthru
      _
    // Predicated region
    $region6: #{protrans_forward.1} parent=1 // pred_check
      _
    $region7: #{protrans_forward.1} parent=1 // pred_check_branch
      %17 = sbr.rel (0) target = $region9
    $region8: #{protrans_forward.1} parent=1 // pred_region
      _
    $region9: #{protrans_forward.1} parent=1 // pred_fallthru
      _
    // Predicated region
    $region10: #{protrans_forward.1} parent=1 // pred_check
      _
    $region11: #{protrans_forward.1} parent=1 // pred_check_branch
      %19 = sbr.rel (0) target = $region13
    $region12: #{protrans_forward.1} parent=1 // pred_region
      _
    $region13: #{protrans_forward.1} parent=1 // pred_fallthru
      _
    // Predicated region
    $region14: #{protrans_forward.1} parent=1 // pred_check
      _
    $region15: #{protrans_forward.1} parent=1 // pred_check_branch
      %21 = sbr.rel (0) target = $region17
    $region16: #{protrans_forward.1} parent=1 // pred_region
      _
    $region17: #{protrans_forward.1} parent=1 // pred_fallthru
      _
    // Predicated region
    $region18: #{protrans_forward.1} parent=1 // pred_check
      _
    $region19: #{protrans_forward.1} parent=1 // pred_check_branch
      %23 = sbr.rel (0) target = $region21
    $region20: #{protrans_forward.1} parent=1 // pred_region
      _
    $region21: #{protrans_forward.1} parent=1 // pred_fallthru
      _
    // Predicated region
    $region22: #{protrans_forward.1} parent=1 // pred_check
      _
    $region23: #{protrans_forward.1} parent=1 // pred_check_branch
      %25 = sbr.rel (0) target = $region25
    $region24: #{protrans_forward.1} parent=1 // pred_region
      _
    $region25: #{protrans_forward.1} parent=1 // pred_fallthru
      _
    // Predicated region
    $region26: #{protrans_forward.1} parent=1 // pred_check
      _
    $region27: #{protrans_forward.1} parent=1 // pred_check_branch
      %27 = sbr.rel (0) target = $region29
    $region28: #{protrans_forward.1} parent=1 // pred_region
      _
    $region29: #{protrans_forward.1} parent=1 // pred_fallthru
      _
    // Predicated region
    $region30: #{protrans_forward.1} parent=1 // pred_check
      _
    $region31: #{protrans_forward.1} parent=1 // pred_check_branch
      %29 = sbr.rel (0) target = $region33
    $region32: #{protrans_forward.1} parent=1 // pred_region
      _
    $region33: #{protrans_forward.1} parent=1 // pred_fallthru
      _
    %v30 = vld [vmem:[%s3] sm:$0x1]
    %v31 = vld [vmem:[%s3 + $0x1] sm:$0x1]
    %v32 = vld [vmem:[%s3 + $0x2] sm:$0x1]
    %v33 = vld [vmem:[%s3 + $0x3] sm:$0x1]
    %v34 = vld [vmem:[%s3 + $0x4] sm:$0x1]
    %v35 = vld [vmem:[%s3 + $0x5] sm:$0x1]
    %v36 = vld [vmem:[%s3 + $0x6] sm:$0x1]
    %v37 = vld [vmem:[%s3 + $0x7] sm:$0x1]
    %v38 = vld [vmem:[%s3 + $0x8] sm:$0x1]
    %v39 = vld [vmem:[%s3 + $0x9] sm:$0x1]
    %v40 = vld [vmem:[%s0] sm:$0xff]
    %v41 = vld [vmem:[%s0 + $0x8] sm:$0xff]
    %v42 = vld [vmem:[%s1] sm:$0xff]
    %v43 = vld [vmem:[%s1 + $0x8] sm:$0xff]
    %v44 = vadd.f32 %v40, %v42
    %v45 = vadd.f32 %v41, %v43
    %vm46 = vcmask 261120
    %v47 = vsel %vm46, %v44, 0.0
    %48 = vadd.xlane.f32.xlu0 %v47
    %v49 = vpop.xlane.xlu0 %48
    %v50 = vsel %vm46, %v45, 0.0
    %51 = vadd.xlane.f32.xlu0 %v50
    %v52 = vpop.xlane.xlu0 %51
    %v53 = vrcp.pop 32.0
    %v54 = vmul.f32 %v49, %v53
    %v55 = vmul.f32 %v52, %v53
    %v56 = vsub.f32 %v44, %v54
    %v57 = vsub.f32 %v45, %v55
    %v58 = vmul.f32 %v56, %v56
    %v59 = vmul.f32 %v57, %v57
    %v60 = vsel %vm46, %v58, 0.0
    %61 = vadd.xlane.f32.xlu0 %v60
    %v62 = vpop.xlane.xlu0 %61
    %v63 = vsel %vm46, %v59, 0.0
    %64 = vadd.xlane.f32.xlu0 %v63
    %v65 = vpop.xlane.xlu0 %64
    %v66 = vmul.f32 %v62, %v53
    %v67 = vmul.f32 %v65, %v53
    %v68 = vadd.f32 %v66, 1e-12
    %v69 = vadd.f32 %v67, 1e-12
    %v70 = vrsqrt.pop %v68
    %v71 = vrsqrt.pop %v69
    %v72 = vmul.f32 %v56, %v70
    %v73 = vmul.f32 %v57, %v71
    %v74 = vlaneseq
    %v75 = vshrl.u32 %v74, 7
    %v76 = vsub.s32 0, %v75
    %v77 = vrot.slane %v30, %v76
    %v78 = vmul.f32 %v72, %v77
    %v79 = vmul.f32 %v73, %v77
    %v80 = vlaneseq
    %v81 = vshrl.u32 %v80, 7
    %v82 = vsub.s32 0, %v81
    %v83 = vrot.slane %v31, %v82
    %v84 = vadd.f32 %v78, %v83
    %v85 = vadd.f32 %v79, %v83
    %v86 = vld [vmem:[%s5] sm:$0xff]
    %v87 = vld [vmem:[%s5 + $0x8] sm:$0xff]
    %v88 = vld [vmem:[%s5 + $0x10] sm:$0xff]
    %v89 = vld [vmem:[%s5 + $0x18] sm:$0xff]
    %v90 = vlaneseq
    %v91 = vshrl.u32 %v90, 7
    %v92 = vsub.s32 0, %v91
    %v93 = vrot.slane %v32, %v92
    %v95 = vsel %vm46, %v84, 0
    %v98 = vsel %vm46, %v85, 0
    %100 = vmatprep.subr.mxu0 0.0
    %101 = vmatpush1.msra.mxu0 %v86
    %102 = vmatprep.subr.mxu0 0.0
    %103 = vmatpush1.msra.mxu0 %v87
    %104 = vmatprep.subr.mxu0 0.0
    %105 = vmatpush1.msra.mxu0 %v88
    %106 = vmatprep.subr.mxu0 0.0
    %107 = vmatpush1.msra.mxu0 %v89
    %108 = vmatprep.subr.mxu0 0.0
    %109 = vmatpush1.msra.mxu0 0.0
    %110 = vmatprep.subr.mxu0 0.0
    %111 = vmatpush1.msra.mxu0 0.0
    %112 = vmatprep.subr.mxu0 0.0
    %113 = vmatpush1.msra.mxu0 0.0
    %114 = vmatprep.subr.mxu0 0.0
    %115 = vmatpush1.msra.mxu0 0.0
    %116 = vmatprep.subr.mxu0 0.0
    %117 = vmatpush1.msra.mxu0 0.0
    %118 = vmatprep.subr.mxu0 0.0
    %119 = vmatpush1.msra.mxu0 0.0
    %120 = vmatprep.subr.mxu0 0.0
    %121 = vmatpush1.msra.mxu0 0.0
    %122 = vmatprep.subr.mxu0 0.0
    %123 = vmatpush1.msra.mxu0 0.0
    %124 = vmatprep.subr.mxu0 0.0
    %125 = vmatpush1.msra.mxu0 0.0
    %126 = vmatprep.subr.mxu0 0.0
    %127 = vmatpush1.msra.mxu0 0.0
    %128 = vmatprep.subr.mxu0 0.0
    %129 = vmatpush1.msra.mxu0 0.0
    %130 = vmatprep.subr.mxu0 0.0
    %131 = vmatpush1.msra.mxu0 0.0
    %132 = vmatprep.subr.mxu0 0.0
    %133 = vmatpush1.msra.mxu0 0.0
    %134 = vmatprep.subr.mxu0 0.0
    %135 = vmatpush1.msra.mxu0 0.0
    %136 = vmatprep.subr.mxu0 0.0
    %137 = vmatpush1.msra.mxu0 0.0
    %138 = vmatprep.subr.mxu0 0.0
    %139 = vmatpush1.msra.mxu0 0.0
    %140 = vmatprep.subr.mxu0 0.0
    %141 = vmatpush1.msra.mxu0 0.0
    %142 = vmatprep.subr.mxu0 0.0
    %143 = vmatpush1.msra.mxu0 0.0
    %144 = vmatprep.subr.mxu0 0.0
    %145 = vmatpush1.msra.mxu0 0.0
    %146 = vmatprep.subr.mxu0 0.0
    %147 = vmatpush1.msra.mxu0 0.0
    %148 = vmatprep.subr.mxu0 0.0
    %149 = vmatpush1.msra.mxu0 0.0
    %150 = vmatprep.subr.mxu0 0.0
    %151 = vmatpush1.msra.mxu0 0.0
    %152 = vmatprep.subr.mxu0 0.0
    %153 = vmatpush1.msra.mxu0 0.0
    %154 = vmatprep.subr.mxu0 0.0
    %155 = vmatpush1.msra.mxu0 0.0
    %156 = vmatprep.subr.mxu0 0.0
    %157 = vmatpush1.msra.mxu0 0.0
    %158 = vmatprep.subr.mxu0 0.0
    %159 = vmatpush1.msra.mxu0 0.0
    %160 = vmatprep.subr.mxu0 0.0
    %161 = vmatpush1.msra.mxu0 0.0
    %162 = vmatprep.subr.mxu0 0.0
    %163 = vmatpush1.msra.mxu0 0.0
    %164 = vmatprep.mubr.f32.mxu0 0.0
    %165 = vmatmul.mubr.f32.gmra.mrb[0].mxu0 %v95
    %v166 = vpop.f32.mrb[0].mxu0
    %v167 = vadd.f32 %v93, %v166
    %v168 = vpop.f32.mrb[0].mxu0
    %169 = vmatprep.mubr.f32.mxu0 0.0
    %170 = vmatmul.mubr.f32.gmra.mrb[0].mxu0 %v98
    %v171 = vpop.f32.mrb[0].mxu0
    %v172 = vadd.f32 %v93, %v171
    %v173 = vpop.f32.mrb[0].mxu0
    %174 = vdwg.mxu0
    %s175 = scalar_lea.vmem %s5, 32
    %v176 = vld [vmem:[%s175] sm:$0xff]
    %v177 = vld [vmem:[%s175 + $0x8] sm:$0xff]
    %v178 = vld [vmem:[%s175 + $0x10] sm:$0xff]
    %v179 = vld [vmem:[%s175 + $0x18] sm:$0xff]
    %v180 = vlaneseq
    %v181 = vshrl.u32 %v180, 7
    %v182 = vsub.s32 0, %v181
    %v183 = vrot.slane %v33, %v182
    %184 = vmatprep.subr.mxu0 0.0
    %185 = vmatpush1.msra.mxu0 %v176
    %186 = vmatprep.subr.mxu0 0.0
    %187 = vmatpush1.msra.mxu0 %v177
    %188 = vmatprep.subr.mxu0 0.0
    %189 = vmatpush1.msra.mxu0 %v178
    %190 = vmatprep.subr.mxu0 0.0
    %191 = vmatpush1.msra.mxu0 %v179
    %192 = vmatprep.subr.mxu0 0.0
    %193 = vmatpush1.msra.mxu0 0.0
    %194 = vmatprep.subr.mxu0 0.0
    %195 = vmatpush1.msra.mxu0 0.0
    %196 = vmatprep.subr.mxu0 0.0
    %197 = vmatpush1.msra.mxu0 0.0
    %198 = vmatprep.subr.mxu0 0.0
    %199 = vmatpush1.msra.mxu0 0.0
    %200 = vmatprep.subr.mxu0 0.0
    %201 = vmatpush1.msra.mxu0 0.0
    %202 = vmatprep.subr.mxu0 0.0
    %203 = vmatpush1.msra.mxu0 0.0
    %204 = vmatprep.subr.mxu0 0.0
    %205 = vmatpush1.msra.mxu0 0.0
    %206 = vmatprep.subr.mxu0 0.0
    %207 = vmatpush1.msra.mxu0 0.0
    %208 = vmatprep.subr.mxu0 0.0
    %209 = vmatpush1.msra.mxu0 0.0
    %210 = vmatprep.subr.mxu0 0.0
    %211 = vmatpush1.msra.mxu0 0.0
    %212 = vmatprep.subr.mxu0 0.0
    %213 = vmatpush1.msra.mxu0 0.0
    %214 = vmatprep.subr.mxu0 0.0
    %215 = vmatpush1.msra.mxu0 0.0
    %216 = vmatprep.subr.mxu0 0.0
    %217 = vmatpush1.msra.mxu0 0.0
    %218 = vmatprep.subr.mxu0 0.0
    %219 = vmatpush1.msra.mxu0 0.0
    %220 = vmatprep.subr.mxu0 0.0
    %221 = vmatpush1.msra.mxu0 0.0
    %222 = vmatprep.subr.mxu0 0.0
    %223 = vmatpush1.msra.mxu0 0.0
    %224 = vmatprep.subr.mxu0 0.0
    %225 = vmatpush1.msra.mxu0 0.0
    %226 = vmatprep.subr.mxu0 0.0
    %227 = vmatpush1.msra.mxu0 0.0
    %228 = vmatprep.subr.mxu0 0.0
    %229 = vmatpush1.msra.mxu0 0.0
    %230 = vmatprep.subr.mxu0 0.0
    %231 = vmatpush1.msra.mxu0 0.0
    %232 = vmatprep.subr.mxu0 0.0
    %233 = vmatpush1.msra.mxu0 0.0
    %234 = vmatprep.subr.mxu0 0.0
    %235 = vmatpush1.msra.mxu0 0.0
    %236 = vmatprep.subr.mxu0 0.0
    %237 = vmatpush1.msra.mxu0 0.0
    %238 = vmatprep.subr.mxu0 0.0
    %239 = vmatpush1.msra.mxu0 0.0
    %240 = vmatprep.subr.mxu0 0.0
    %241 = vmatpush1.msra.mxu0 0.0
    %242 = vmatprep.subr.mxu0 0.0
    %243 = vmatpush1.msra.mxu0 0.0
    %244 = vmatprep.subr.mxu0 0.0
    %245 = vmatpush1.msra.mxu0 0.0
    %246 = vmatprep.subr.mxu0 0.0
    %247 = vmatpush1.msra.mxu0 0.0
    %248 = vmatprep.mubr.f32.mxu0 0.0
    %249 = vmatmul.mubr.f32.gmra.mrb[0].mxu0 %v95
    %v250 = vpop.f32.mrb[0].mxu0
    %v251 = vadd.f32 %v183, %v250
    %v252 = vpop.f32.mrb[0].mxu0
    %253 = vmatprep.mubr.f32.mxu0 0.0
    %254 = vmatmul.mubr.f32.gmra.mrb[0].mxu0 %v98
    %v255 = vpop.f32.mrb[0].mxu0
    %v256 = vadd.f32 %v183, %v255
    %v257 = vpop.f32.mrb[0].mxu0
    %258 = vdwg.mxu0
    %s259 = scalar_lea.vmem %s5, 64
    %v260 = vld [vmem:[%s259] sm:$0xff]
    %v261 = vld [vmem:[%s259 + $0x8] sm:$0xff]
    %v262 = vld [vmem:[%s259 + $0x10] sm:$0xff]
    %v263 = vld [vmem:[%s259 + $0x18] sm:$0xff]
    %v264 = vlaneseq
    %v265 = vshrl.u32 %v264, 7
    %v266 = vsub.s32 0, %v265
    %v267 = vrot.slane %v34, %v266
    %268 = vmatprep.subr.mxu0 0.0
    %269 = vmatpush1.msra.mxu0 %v260
    %270 = vmatprep.subr.mxu0 0.0
    %271 = vmatpush1.msra.mxu0 %v261
    %272 = vmatprep.subr.mxu0 0.0
    %273 = vmatpush1.msra.mxu0 %v262
    %274 = vmatprep.subr.mxu0 0.0
    %275 = vmatpush1.msra.mxu0 %v263
    %276 = vmatprep.subr.mxu0 0.0
    %277 = vmatpush1.msra.mxu0 0.0
    %278 = vmatprep.subr.mxu0 0.0
    %279 = vmatpush1.msra.mxu0 0.0
    %280 = vmatprep.subr.mxu0 0.0
    %281 = vmatpush1.msra.mxu0 0.0
    %282 = vmatprep.subr.mxu0 0.0
    %283 = vmatpush1.msra.mxu0 0.0
    %284 = vmatprep.subr.mxu0 0.0
    %285 = vmatpush1.msra.mxu0 0.0
    %286 = vmatprep.subr.mxu0 0.0
    %287 = vmatpush1.msra.mxu0 0.0
    %288 = vmatprep.subr.mxu0 0.0
    %289 = vmatpush1.msra.mxu0 0.0
    %290 = vmatprep.subr.mxu0 0.0
    %291 = vmatpush1.msra.mxu0 0.0
    %292 = vmatprep.subr.mxu0 0.0
    %293 = vmatpush1.msra.mxu0 0.0
    %294 = vmatprep.subr.mxu0 0.0
    %295 = vmatpush1.msra.mxu0 0.0
    %296 = vmatprep.subr.mxu0 0.0
    %297 = vmatpush1.msra.mxu0 0.0
    %298 = vmatprep.subr.mxu0 0.0
    %299 = vmatpush1.msra.mxu0 0.0
    %300 = vmatprep.subr.mxu0 0.0
    %301 = vmatpush1.msra.mxu0 0.0
    %302 = vmatprep.subr.mxu0 0.0
    %303 = vmatpush1.msra.mxu0 0.0
    %304 = vmatprep.subr.mxu0 0.0
    %305 = vmatpush1.msra.mxu0 0.0
    %306 = vmatprep.subr.mxu0 0.0
    %307 = vmatpush1.msra.mxu0 0.0
    %308 = vmatprep.subr.mxu0 0.0
    %309 = vmatpush1.msra.mxu0 0.0
    %310 = vmatprep.subr.mxu0 0.0
    %311 = vmatpush1.msra.mxu0 0.0
    %312 = vmatprep.subr.mxu0 0.0
    %313 = vmatpush1.msra.mxu0 0.0
    %314 = vmatprep.subr.mxu0 0.0
    %315 = vmatpush1.msra.mxu0 0.0
    %316 = vmatprep.subr.mxu0 0.0
    %317 = vmatpush1.msra.mxu0 0.0
    %318 = vmatprep.subr.mxu0 0.0
    %319 = vmatpush1.msra.mxu0 0.0
    %320 = vmatprep.subr.mxu0 0.0
    %321 = vmatpush1.msra.mxu0 0.0
    %322 = vmatprep.subr.mxu0 0.0
    %323 = vmatpush1.msra.mxu0 0.0
    %324 = vmatprep.subr.mxu0 0.0
    %325 = vmatpush1.msra.mxu0 0.0
    %326 = vmatprep.subr.mxu0 0.0
    %327 = vmatpush1.msra.mxu0 0.0
    %328 = vmatprep.subr.mxu0 0.0
    %329 = vmatpush1.msra.mxu0 0.0
    %330 = vmatprep.subr.mxu0 0.0
    %331 = vmatpush1.msra.mxu0 0.0
    %332 = vmatprep.mubr.f32.mxu0 0.0
    %333 = vmatmul.mubr.f32.gmra.mrb[0].mxu0 %v95
    %v334 = vpop.f32.mrb[0].mxu0
    %v335 = vadd.f32 %v267, %v334
    %v336 = vpop.f32.mrb[0].mxu0
    %337 = vmatprep.mubr.f32.mxu0 0.0
    %338 = vmatmul.mubr.f32.gmra.mrb[0].mxu0 %v98
    %v339 = vpop.f32.mrb[0].mxu0
    %v340 = vadd.f32 %v267, %v339
    %v341 = vpop.f32.mrb[0].mxu0
    %342 = vdwg.mxu0
    %v343 = vld [vmem:[%s2] sm:$0xff]
    %v344 = vld [vmem:[%s2 + $0x8] sm:$0xff]
    %v345 = vlaneseq
    %v346 = vand.u32 %v345, 127
    %vm347 = vcmp.ge.s32.totalorder %v346, 0
    %vm348 = vcmp.lt.s32.totalorder %v346, 8
    %vm349 = vmand %vm347, %vm348
    %v350 = vsel %vm349, 1, 0
    %vm351 = vcmp.eq.s32.totalorder %v350, 1
    %v352 = vsel %vm351, %v167, 0.0
    %v353 = vsel %vm351, %v172, 0.0
    %v355 = vsel %vm46, %v352, 0
    %v358 = vsel %vm46, %v353, 0
    %v361 = vsel %vm46, %v251, 0
    %v364 = vsel %vm46, %v256, 0
    %366 = vmatprep.subr.mxu0 0.0
    %367 = vmatpush1.xpose.msra.mxu0 %v361
    %368 = vmatprep.subr.mxu0 0.0
    %369 = vmatpush1.xpose.msra.mxu0 %v364
    %370 = vmatprep.subr.mxu0 0.0
    %371 = vmatpush1.xpose.msra.mxu0 0.0
    %372 = vmatprep.subr.mxu0 0.0
    %373 = vmatpush1.xpose.msra.mxu0 0.0
    %374 = vmatprep.subr.mxu0 0.0
    %375 = vmatpush1.xpose.msra.mxu0 0.0
    %376 = vmatprep.subr.mxu0 0.0
    %377 = vmatpush1.xpose.msra.mxu0 0.0
    %378 = vmatprep.subr.mxu0 0.0
    %379 = vmatpush1.xpose.msra.mxu0 0.0
    %380 = vmatprep.subr.mxu0 0.0
    %381 = vmatpush1.xpose.msra.mxu0 0.0
    %382 = vmatprep.subr.mxu0 0.0
    %383 = vmatpush1.xpose.msra.mxu0 0.0
    %384 = vmatprep.subr.mxu0 0.0
    %385 = vmatpush1.xpose.msra.mxu0 0.0
    %386 = vmatprep.subr.mxu0 0.0
    %387 = vmatpush1.xpose.msra.mxu0 0.0
    %388 = vmatprep.subr.mxu0 0.0
    %389 = vmatpush1.xpose.msra.mxu0 0.0
    %390 = vmatprep.subr.mxu0 0.0
    %391 = vmatpush1.xpose.msra.mxu0 0.0
    %392 = vmatprep.subr.mxu0 0.0
    %393 = vmatpush1.xpose.msra.mxu0 0.0
    %394 = vmatprep.subr.mxu0 0.0
    %395 = vmatpush1.xpose.msra.mxu0 0.0
    %396 = vmatprep.subr.mxu0 0.0
    %397 = vmatpush1.xpose.msra.mxu0 0.0
    %398 = vmatprep.subr.mxu0 0.0
    %399 = vmatpush1.xpose.msra.mxu0 0.0
    %400 = vmatprep.subr.mxu0 0.0
    %401 = vmatpush1.xpose.msra.mxu0 0.0
    %402 = vmatprep.subr.mxu0 0.0
    %403 = vmatpush1.xpose.msra.mxu0 0.0
    %404 = vmatprep.subr.mxu0 0.0
    %405 = vmatpush1.xpose.msra.mxu0 0.0
    %406 = vmatprep.subr.mxu0 0.0
    %407 = vmatpush1.xpose.msra.mxu0 0.0
    %408 = vmatprep.subr.mxu0 0.0
    %409 = vmatpush1.xpose.msra.mxu0 0.0
    %410 = vmatprep.subr.mxu0 0.0
    %411 = vmatpush1.xpose.msra.mxu0 0.0
    %412 = vmatprep.subr.mxu0 0.0
    %413 = vmatpush1.xpose.msra.mxu0 0.0
    %414 = vmatprep.subr.mxu0 0.0
    %415 = vmatpush1.xpose.msra.mxu0 0.0
    %416 = vmatprep.subr.mxu0 0.0
    %417 = vmatpush1.xpose.msra.mxu0 0.0
    %418 = vmatprep.subr.mxu0 0.0
    %419 = vmatpush1.xpose.msra.mxu0 0.0
    %420 = vmatprep.subr.mxu0 0.0
    %421 = vmatpush1.xpose.msra.mxu0 0.0
    %422 = vmatprep.subr.mxu0 0.0
    %423 = vmatpush1.xpose.msra.mxu0 0.0
    %424 = vmatprep.subr.mxu0 0.0
    %425 = vmatpush1.xpose.msra.mxu0 0.0
    %426 = vmatprep.subr.mxu0 0.0
    %427 = vmatpush1.xpose.msra.mxu0 0.0
    %428 = vmatprep.subr.mxu0 0.0
    %429 = vmatpush1.xpose.msra.mxu0 0.0
    %430 = vmatprep.mubr.f32.mxu0 0.0
    %431 = vmatmul.mubr.f32.gmra.mrb[0].mxu0 %v355
    %v432 = vpop.f32.mrb[0].mxu0
    %v433 = vadd.f32 %v343, %v432
    %v434 = vpop.f32.mrb[0].mxu0
    %435 = vmatprep.mubr.f32.mxu0 0.0
    %436 = vmatmul.mubr.f32.gmra.mrb[0].mxu0 %v358
    %v437 = vpop.f32.mrb[0].mxu0
    %v438 = vadd.f32 %v344, %v437
    %v439 = vpop.f32.mrb[0].mxu0
    %440 = vdwg.mxu0
    %vm441 = vcmask 130048
    %v442 = vsel %vm441, %v433, -inf
    %443 = vmax.xlane.f32.xlu0 %v442
    %v444 = vpop.xlane.xlu0 %443
    %v445 = vsel %vm441, %v438, -inf
    %446 = vmax.xlane.f32.xlu0 %v445
    %v447 = vpop.xlane.xlu0 %446
    %v448 = vsub.f32 %v433, %v444
    %v449 = vsub.f32 %v438, %v447
    %v450 = vmul.f32 %v448, 1.442695
    %v451 = vpow.pop %v450
    %v452 = vmul.f32 %v449, 1.442695
    %v453 = vpow.pop %v452
    %v454 = vsel %vm441, %v451, 0.0
    %455 = vadd.xlane.f32.xlu0 %v454
    %v456 = vpop.xlane.xlu0 %455
    %v457 = vsel %vm441, %v453, 0.0
    %458 = vadd.xlane.f32.xlu0 %v457
    %v459 = vpop.xlane.xlu0 %458
    %v460 = vrcp.pop %v456
    %v461 = vmul.f32 %v451, %v460
    %v462 = vrcp.pop %v459
    %v463 = vmul.f32 %v453, %v462
    %v464 = vsel %vm351, %v335, 0.0
    %v465 = vsel %vm351, %v340, 0.0
    %vm466 = vcmp.ge.s32.totalorder %v346, 8
    %vm467 = vcmp.lt.s32.totalorder %v346, 16
    %vm468 = vmand %vm466, %vm467
    %v469 = vsel %vm468, 1, 0
    %vm470 = vcmp.eq.s32.totalorder %v469, 1
    %v471 = vsel %vm470, %v167, 0.0
    %v472 = vsel %vm470, %v172, 0.0
    %v474 = vsel %vm46, %v471, 0
    %v477 = vsel %vm46, %v472, 0
    %479 = vmatprep.subr.mxu0 0.0
    %480 = vmatpush1.xpose.msra.mxu0 %v361
    %481 = vmatprep.subr.mxu0 0.0
    %482 = vmatpush1.xpose.msra.mxu0 %v364
    %483 = vmatprep.subr.mxu0 0.0
    %484 = vmatpush1.xpose.msra.mxu0 0.0
    %485 = vmatprep.subr.mxu0 0.0
    %486 = vmatpush1.xpose.msra.mxu0 0.0
    %487 = vmatprep.subr.mxu0 0.0
    %488 = vmatpush1.xpose.msra.mxu0 0.0
    %489 = vmatprep.subr.mxu0 0.0
    %490 = vmatpush1.xpose.msra.mxu0 0.0
    %491 = vmatprep.subr.mxu0 0.0
    %492 = vmatpush1.xpose.msra.mxu0 0.0
    %493 = vmatprep.subr.mxu0 0.0
    %494 = vmatpush1.xpose.msra.mxu0 0.0
    %495 = vmatprep.subr.mxu0 0.0
    %496 = vmatpush1.xpose.msra.mxu0 0.0
    %497 = vmatprep.subr.mxu0 0.0
    %498 = vmatpush1.xpose.msra.mxu0 0.0
    %499 = vmatprep.subr.mxu0 0.0
    %500 = vmatpush1.xpose.msra.mxu0 0.0
    %501 = vmatprep.subr.mxu0 0.0
    %502 = vmatpush1.xpose.msra.mxu0 0.0
    %503 = vmatprep.subr.mxu0 0.0
    %504 = vmatpush1.xpose.msra.mxu0 0.0
    %505 = vmatprep.subr.mxu0 0.0
    %506 = vmatpush1.xpose.msra.mxu0 0.0
    %507 = vmatprep.subr.mxu0 0.0
    %508 = vmatpush1.xpose.msra.mxu0 0.0
    %509 = vmatprep.subr.mxu0 0.0
    %510 = vmatpush1.xpose.msra.mxu0 0.0
    %511 = vmatprep.subr.mxu0 0.0
    %512 = vmatpush1.xpose.msra.mxu0 0.0
    %513 = vmatprep.subr.mxu0 0.0
    %514 = vmatpush1.xpose.msra.mxu0 0.0
    %515 = vmatprep.subr.mxu0 0.0
    %516 = vmatpush1.xpose.msra.mxu0 0.0
    %517 = vmatprep.subr.mxu0 0.0
    %518 = vmatpush1.xpose.msra.mxu0 0.0
    %519 = vmatprep.subr.mxu0 0.0
    %520 = vmatpush1.xpose.msra.mxu0 0.0
    %521 = vmatprep.subr.mxu0 0.0
    %522 = vmatpush1.xpose.msra.mxu0 0.0
    %523 = vmatprep.subr.mxu0 0.0
    %524 = vmatpush1.xpose.msra.mxu0 0.0
    %525 = vmatprep.subr.mxu0 0.0
    %526 = vmatpush1.xpose.msra.mxu0 0.0
    %527 = vmatprep.subr.mxu0 0.0
    %528 = vmatpush1.xpose.msra.mxu0 0.0
    %529 = vmatprep.subr.mxu0 0.0
    %530 = vmatpush1.xpose.msra.mxu0 0.0
    %531 = vmatprep.subr.mxu0 0.0
    %532 = vmatpush1.xpose.msra.mxu0 0.0
    %533 = vmatprep.subr.mxu0 0.0
    %534 = vmatpush1.xpose.msra.mxu0 0.0
    %535 = vmatprep.subr.mxu0 0.0
    %536 = vmatpush1.xpose.msra.mxu0 0.0
    %537 = vmatprep.subr.mxu0 0.0
    %538 = vmatpush1.xpose.msra.mxu0 0.0
    %539 = vmatprep.subr.mxu0 0.0
    %540 = vmatpush1.xpose.msra.mxu0 0.0
    %541 = vmatprep.subr.mxu0 0.0
    %542 = vmatpush1.xpose.msra.mxu0 0.0
    %543 = vmatprep.mubr.f32.mxu0 0.0
    %544 = vmatmul.mubr.f32.gmra.mrb[0].mxu0 %v474
    %v545 = vpop.f32.mrb[0].mxu0
    %v546 = vadd.f32 %v343, %v545
    %v547 = vpop.f32.mrb[0].mxu0
    %548 = vmatprep.mubr.f32.mxu0 0.0
    %549 = vmatmul.mubr.f32.gmra.mrb[0].mxu0 %v477
    %v550 = vpop.f32.mrb[0].mxu0
    %v551 = vadd.f32 %v344, %v550
    %v552 = vpop.f32.mrb[0].mxu0
    %553 = vdwg.mxu0
    %v554 = vsel %vm441, %v546, -inf
    %555 = vmax.xlane.f32.xlu0 %v554
    %v556 = vpop.xlane.xlu0 %555
    %v557 = vsel %vm441, %v551, -inf
    %558 = vmax.xlane.f32.xlu0 %v557
    %v559 = vpop.xlane.xlu0 %558
    %v560 = vsub.f32 %v546, %v556
    %v561 = vsub.f32 %v551, %v559
    %v562 = vmul.f32 %v560, 1.442695
    %v563 = vpow.pop %v562
    %v564 = vmul.f32 %v561, 1.442695
    %v565 = vpow.pop %v564
    %v566 = vsel %vm441, %v563, 0.0
    %567 = vadd.xlane.f32.xlu0 %v566
    %v568 = vpop.xlane.xlu0 %567
    %v569 = vsel %vm441, %v565, 0.0
    %570 = vadd.xlane.f32.xlu0 %v569
    %v571 = vpop.xlane.xlu0 %570
    %v572 = vrcp.pop %v568
    %v573 = vmul.f32 %v563, %v572
    %v574 = vrcp.pop %v571
    %v575 = vmul.f32 %v565, %v574
    %v576 = vsel %vm470, %v335, 0.0
    %v577 = vsel %vm470, %v340, 0.0
    %v579 = vsel %vm441, %v573, 0
    %v582 = vsel %vm441, %v575, 0
    %584 = vmatprep.subr.mxu0 0.0
    %585 = vmatpush1.msra.mxu0 %v576
    %586 = vmatprep.subr.mxu0 0.0
    %587 = vmatpush1.msra.mxu0 %v577
    %588 = vmatprep.subr.mxu0 0.0
    %589 = vmatpush1.msra.mxu0 0.0
    %590 = vmatprep.subr.mxu0 0.0
    %591 = vmatpush1.msra.mxu0 0.0
    %592 = vmatprep.subr.mxu0 0.0
    %593 = vmatpush1.msra.mxu0 0.0
    %594 = vmatprep.subr.mxu0 0.0
    %595 = vmatpush1.msra.mxu0 0.0
    %596 = vmatprep.subr.mxu0 0.0
    %597 = vmatpush1.msra.mxu0 0.0
    %598 = vmatprep.subr.mxu0 0.0
    %599 = vmatpush1.msra.mxu0 0.0
    %600 = vmatprep.subr.mxu0 0.0
    %601 = vmatpush1.msra.mxu0 0.0
    %602 = vmatprep.subr.mxu0 0.0
    %603 = vmatpush1.msra.mxu0 0.0
    %604 = vmatprep.subr.mxu0 0.0
    %605 = vmatpush1.msra.mxu0 0.0
    %606 = vmatprep.subr.mxu0 0.0
    %607 = vmatpush1.msra.mxu0 0.0
    %608 = vmatprep.subr.mxu0 0.0
    %609 = vmatpush1.msra.mxu0 0.0
    %610 = vmatprep.subr.mxu0 0.0
    %611 = vmatpush1.msra.mxu0 0.0
    %612 = vmatprep.subr.mxu0 0.0
    %613 = vmatpush1.msra.mxu0 0.0
    %614 = vmatprep.subr.mxu0 0.0
    %615 = vmatpush1.msra.mxu0 0.0
    %616 = vmatprep.subr.mxu0 0.0
    %617 = vmatpush1.msra.mxu0 0.0
    %618 = vmatprep.subr.mxu0 0.0
    %619 = vmatpush1.msra.mxu0 0.0
    %620 = vmatprep.subr.mxu0 0.0
    %621 = vmatpush1.msra.mxu0 0.0
    %622 = vmatprep.subr.mxu0 0.0
    %623 = vmatpush1.msra.mxu0 0.0
    %624 = vmatprep.subr.mxu0 0.0
    %625 = vmatpush1.msra.mxu0 0.0
    %626 = vmatprep.subr.mxu0 0.0
    %627 = vmatpush1.msra.mxu0 0.0
    %628 = vmatprep.subr.mxu0 0.0
    %629 = vmatpush1.msra.mxu0 0.0
    %630 = vmatprep.subr.mxu0 0.0
    %631 = vmatpush1.msra.mxu0 0.0
    %632 = vmatprep.subr.mxu0 0.0
    %633 = vmatpush1.msra.mxu0 0.0
    %634 = vmatprep.subr.mxu0 0.0
    %635 = vmatpush1.msra.mxu0 0.0
    %636 = vmatprep.subr.mxu0 0.0
    %637 = vmatpush1.msra.mxu0 0.0
    %638 = vmatprep.subr.mxu0 0.0
    %639 = vmatpush1.msra.mxu0 0.0
    %640 = vmatprep.subr.mxu0 0.0
    %641 = vmatpush1.msra.mxu0 0.0
    %642 = vmatprep.subr.mxu0 0.0
    %643 = vmatpush1.msra.mxu0 0.0
    %644 = vmatprep.subr.mxu0 0.0
    %645 = vmatpush1.msra.mxu0 0.0
    %646 = vmatprep.subr.mxu0 0.0
    %647 = vmatpush1.msra.mxu0 0.0
    %648 = vmatprep.mubr.f32.mxu0 0.0
    %649 = vmatmul.mubr.f32.gmra.mrb[0].mxu0 %v579
    %v650 = vpop.f32.mrb[0].mxu0
    %v651 = vadd.f32 0.0, %v650
    %v652 = vpop.f32.mrb[0].mxu0
    %653 = vmatprep.mubr.f32.mxu0 0.0
    %654 = vmatmul.mubr.f32.gmra.mrb[0].mxu0 %v582
    %v655 = vpop.f32.mrb[0].mxu0
    %v656 = vadd.f32 0.0, %v655
    %v657 = vpop.f32.mrb[0].mxu0
    %658 = vdwg.mxu0
    %v660 = vsel %vm441, %v461, 0
    %v663 = vsel %vm441, %v463, 0
    %665 = vmatprep.subr.mxu0 0.0
    %666 = vmatpush1.msra.mxu0 %v464
    %667 = vmatprep.subr.mxu0 0.0
    %668 = vmatpush1.msra.mxu0 %v465
    %669 = vmatprep.subr.mxu0 0.0
    %670 = vmatpush1.msra.mxu0 0.0
    %671 = vmatprep.subr.mxu0 0.0
    %672 = vmatpush1.msra.mxu0 0.0
    %673 = vmatprep.subr.mxu0 0.0
    %674 = vmatpush1.msra.mxu0 0.0
    %675 = vmatprep.subr.mxu0 0.0
    %676 = vmatpush1.msra.mxu0 0.0
    %677 = vmatprep.subr.mxu0 0.0
    %678 = vmatpush1.msra.mxu0 0.0
    %679 = vmatprep.subr.mxu0 0.0
    %680 = vmatpush1.msra.mxu0 0.0
    %681 = vmatprep.subr.mxu0 0.0
    %682 = vmatpush1.msra.mxu0 0.0
    %683 = vmatprep.subr.mxu0 0.0
    %684 = vmatpush1.msra.mxu0 0.0
    %685 = vmatprep.subr.mxu0 0.0
    %686 = vmatpush1.msra.mxu0 0.0
    %687 = vmatprep.subr.mxu0 0.0
    %688 = vmatpush1.msra.mxu0 0.0
    %689 = vmatprep.subr.mxu0 0.0
    %690 = vmatpush1.msra.mxu0 0.0
    %691 = vmatprep.subr.mxu0 0.0
    %692 = vmatpush1.msra.mxu0 0.0
    %693 = vmatprep.subr.mxu0 0.0
    %694 = vmatpush1.msra.mxu0 0.0
    %695 = vmatprep.subr.mxu0 0.0
    %696 = vmatpush1.msra.mxu0 0.0
    %697 = vmatprep.subr.mxu0 0.0
    %698 = vmatpush1.msra.mxu0 0.0
    %699 = vmatprep.subr.mxu0 0.0
    %700 = vmatpush1.msra.mxu0 0.0
    %701 = vmatprep.subr.mxu0 0.0
    %702 = vmatpush1.msra.mxu0 0.0
    %703 = vmatprep.subr.mxu0 0.0
    %704 = vmatpush1.msra.mxu0 0.0
    %705 = vmatprep.subr.mxu0 0.0
    %706 = vmatpush1.msra.mxu0 0.0
    %707 = vmatprep.subr.mxu0 0.0
    %708 = vmatpush1.msra.mxu0 0.0
    %709 = vmatprep.subr.mxu0 0.0
    %710 = vmatpush1.msra.mxu0 0.0
    %711 = vmatprep.subr.mxu0 0.0
    %712 = vmatpush1.msra.mxu0 0.0
    %713 = vmatprep.subr.mxu0 0.0
    %714 = vmatpush1.msra.mxu0 0.0
    %715 = vmatprep.subr.mxu0 0.0
    %716 = vmatpush1.msra.mxu0 0.0
    %717 = vmatprep.subr.mxu0 0.0
    %718 = vmatpush1.msra.mxu0 0.0
    %719 = vmatprep.subr.mxu0 0.0
    %720 = vmatpush1.msra.mxu0 0.0
    %721 = vmatprep.subr.mxu0 0.0
    %722 = vmatpush1.msra.mxu0 0.0
    %723 = vmatprep.subr.mxu0 0.0
    %724 = vmatpush1.msra.mxu0 0.0
    %725 = vmatprep.subr.mxu0 0.0
    %726 = vmatpush1.msra.mxu0 0.0
    %727 = vmatprep.subr.mxu0 0.0
    %728 = vmatpush1.msra.mxu0 0.0
    %729 = vmatprep.mubr.f32.mxu0 0.0
    %730 = vmatmul.mubr.f32.gmra.mrb[0].mxu0 %v660
    %v731 = vpop.f32.mrb[0].mxu0
    %v732 = vadd.f32 %v651, %v731
    %v733 = vpop.f32.mrb[0].mxu0
    %734 = vmatprep.mubr.f32.mxu0 0.0
    %735 = vmatmul.mubr.f32.gmra.mrb[0].mxu0 %v663
    %v736 = vpop.f32.mrb[0].mxu0
    %v737 = vadd.f32 %v656, %v736
    %v738 = vpop.f32.mrb[0].mxu0
    %739 = vdwg.mxu0
    %vm740 = vcmp.ge.s32.totalorder %v346, 16
    %vm741 = vcmp.lt.s32.totalorder %v346, 24
    %vm742 = vmand %vm740, %vm741
    %v743 = vsel %vm742, 1, 0
    %vm744 = vcmp.eq.s32.totalorder %v743, 1
    %v745 = vsel %vm744, %v167, 0.0
    %v746 = vsel %vm744, %v172, 0.0
    %v748 = vsel %vm46, %v745, 0
    %v751 = vsel %vm46, %v746, 0
    %753 = vmatprep.subr.mxu0 0.0
    %754 = vmatpush1.xpose.msra.mxu0 %v361
    %755 = vmatprep.subr.mxu0 0.0
    %756 = vmatpush1.xpose.msra.mxu0 %v364
    %757 = vmatprep.subr.mxu0 0.0
    %758 = vmatpush1.xpose.msra.mxu0 0.0
    %759 = vmatprep.subr.mxu0 0.0
    %760 = vmatpush1.xpose.msra.mxu0 0.0
    %761 = vmatprep.subr.mxu0 0.0
    %762 = vmatpush1.xpose.msra.mxu0 0.0
    %763 = vmatprep.subr.mxu0 0.0
    %764 = vmatpush1.xpose.msra.mxu0 0.0
    %765 = vmatprep.subr.mxu0 0.0
    %766 = vmatpush1.xpose.msra.mxu0 0.0
    %767 = vmatprep.subr.mxu0 0.0
    %768 = vmatpush1.xpose.msra.mxu0 0.0
    %769 = vmatprep.subr.mxu0 0.0
    %770 = vmatpush1.xpose.msra.mxu0 0.0
    %771 = vmatprep.subr.mxu0 0.0
    %772 = vmatpush1.xpose.msra.mxu0 0.0
    %773 = vmatprep.subr.mxu0 0.0
    %774 = vmatpush1.xpose.msra.mxu0 0.0
    %775 = vmatprep.subr.mxu0 0.0
    %776 = vmatpush1.xpose.msra.mxu0 0.0
    %777 = vmatprep.subr.mxu0 0.0
    %778 = vmatpush1.xpose.msra.mxu0 0.0
    %779 = vmatprep.subr.mxu0 0.0
    %780 = vmatpush1.xpose.msra.mxu0 0.0
    %781 = vmatprep.subr.mxu0 0.0
    %782 = vmatpush1.xpose.msra.mxu0 0.0
    %783 = vmatprep.subr.mxu0 0.0
    %784 = vmatpush1.xpose.msra.mxu0 0.0
    %785 = vmatprep.subr.mxu0 0.0
    %786 = vmatpush1.xpose.msra.mxu0 0.0
    %787 = vmatprep.subr.mxu0 0.0
    %788 = vmatpush1.xpose.msra.mxu0 0.0
    %789 = vmatprep.subr.mxu0 0.0
    %790 = vmatpush1.xpose.msra.mxu0 0.0
    %791 = vmatprep.subr.mxu0 0.0
    %792 = vmatpush1.xpose.msra.mxu0 0.0
    %793 = vmatprep.subr.mxu0 0.0
    %794 = vmatpush1.xpose.msra.mxu0 0.0
    %795 = vmatprep.subr.mxu0 0.0
    %796 = vmatpush1.xpose.msra.mxu0 0.0
    %797 = vmatprep.subr.mxu0 0.0
    %798 = vmatpush1.xpose.msra.mxu0 0.0
    %799 = vmatprep.subr.mxu0 0.0
    %800 = vmatpush1.xpose.msra.mxu0 0.0
    %801 = vmatprep.subr.mxu0 0.0
    %802 = vmatpush1.xpose.msra.mxu0 0.0
    %803 = vmatprep.subr.mxu0 0.0
    %804 = vmatpush1.xpose.msra.mxu0 0.0
    %805 = vmatprep.subr.mxu0 0.0
    %806 = vmatpush1.xpose.msra.mxu0 0.0
    %807 = vmatprep.subr.mxu0 0.0
    %808 = vmatpush1.xpose.msra.mxu0 0.0
    %809 = vmatprep.subr.mxu0 0.0
    %810 = vmatpush1.xpose.msra.mxu0 0.0
    %811 = vmatprep.subr.mxu0 0.0
    %812 = vmatpush1.xpose.msra.mxu0 0.0
    %813 = vmatprep.subr.mxu0 0.0
    %814 = vmatpush1.xpose.msra.mxu0 0.0
    %815 = vmatprep.subr.mxu0 0.0
    %816 = vmatpush1.xpose.msra.mxu0 0.0
    %817 = vmatprep.mubr.f32.mxu0 0.0
    %818 = vmatmul.mubr.f32.gmra.mrb[0].mxu0 %v748
    %v819 = vpop.f32.mrb[0].mxu0
    %v820 = vadd.f32 %v343, %v819
    %v821 = vpop.f32.mrb[0].mxu0
    %822 = vmatprep.mubr.f32.mxu0 0.0
    %823 = vmatmul.mubr.f32.gmra.mrb[0].mxu0 %v751
    %v824 = vpop.f32.mrb[0].mxu0
    %v825 = vadd.f32 %v344, %v824
    %v826 = vpop.f32.mrb[0].mxu0
    %827 = vdwg.mxu0
    %v828 = vsel %vm441, %v820, -inf
    %829 = vmax.xlane.f32.xlu0 %v828
    %v830 = vpop.xlane.xlu0 %829
    %v831 = vsel %vm441, %v825, -inf
    %832 = vmax.xlane.f32.xlu0 %v831
    %v833 = vpop.xlane.xlu0 %832
    %v834 = vsub.f32 %v820, %v830
    %v835 = vsub.f32 %v825, %v833
    %v836 = vmul.f32 %v834, 1.442695
    %v837 = vpow.pop %v836
    %v838 = vmul.f32 %v835, 1.442695
    %v839 = vpow.pop %v838
    %v840 = vsel %vm441, %v837, 0.0
    %841 = vadd.xlane.f32.xlu0 %v840
    %v842 = vpop.xlane.xlu0 %841
    %v843 = vsel %vm441, %v839, 0.0
    %844 = vadd.xlane.f32.xlu0 %v843
    %v845 = vpop.xlane.xlu0 %844
    %v846 = vrcp.pop %v842
    %v847 = vmul.f32 %v837, %v846
    %v848 = vrcp.pop %v845
    %v849 = vmul.f32 %v839, %v848
    %v850 = vsel %vm744, %v335, 0.0
    %v851 = vsel %vm744, %v340, 0.0
    %v853 = vsel %vm441, %v847, 0
    %v856 = vsel %vm441, %v849, 0
    %858 = vmatprep.subr.mxu0 0.0
    %859 = vmatpush1.msra.mxu0 %v850
    %860 = vmatprep.subr.mxu0 0.0
    %861 = vmatpush1.msra.mxu0 %v851
    %862 = vmatprep.subr.mxu0 0.0
    %863 = vmatpush1.msra.mxu0 0.0
    %864 = vmatprep.subr.mxu0 0.0
    %865 = vmatpush1.msra.mxu0 0.0
    %866 = vmatprep.subr.mxu0 0.0
    %867 = vmatpush1.msra.mxu0 0.0
    %868 = vmatprep.subr.mxu0 0.0
    %869 = vmatpush1.msra.mxu0 0.0
    %870 = vmatprep.subr.mxu0 0.0
    %871 = vmatpush1.msra.mxu0 0.0
    %872 = vmatprep.subr.mxu0 0.0
    %873 = vmatpush1.msra.mxu0 0.0
    %874 = vmatprep.subr.mxu0 0.0
    %875 = vmatpush1.msra.mxu0 0.0
    %876 = vmatprep.subr.mxu0 0.0
    %877 = vmatpush1.msra.mxu0 0.0
    %878 = vmatprep.subr.mxu0 0.0
    %879 = vmatpush1.msra.mxu0 0.0
    %880 = vmatprep.subr.mxu0 0.0
    %881 = vmatpush1.msra.mxu0 0.0
    %882 = vmatprep.subr.mxu0 0.0
    %883 = vmatpush1.msra.mxu0 0.0
    %884 = vmatprep.subr.mxu0 0.0
    %885 = vmatpush1.msra.mxu0 0.0
    %886 = vmatprep.subr.mxu0 0.0
    %887 = vmatpush1.msra.mxu0 0.0
    %888 = vmatprep.subr.mxu0 0.0
    %889 = vmatpush1.msra.mxu0 0.0
    %890 = vmatprep.subr.mxu0 0.0
    %891 = vmatpush1.msra.mxu0 0.0
    %892 = vmatprep.subr.mxu0 0.0
    %893 = vmatpush1.msra.mxu0 0.0
    %894 = vmatprep.subr.mxu0 0.0
    %895 = vmatpush1.msra.mxu0 0.0
    %896 = vmatprep.subr.mxu0 0.0
    %897 = vmatpush1.msra.mxu0 0.0
    %898 = vmatprep.subr.mxu0 0.0
    %899 = vmatpush1.msra.mxu0 0.0
    %900 = vmatprep.subr.mxu0 0.0
    %901 = vmatpush1.msra.mxu0 0.0
    %902 = vmatprep.subr.mxu0 0.0
    %903 = vmatpush1.msra.mxu0 0.0
    %904 = vmatprep.subr.mxu0 0.0
    %905 = vmatpush1.msra.mxu0 0.0
    %906 = vmatprep.subr.mxu0 0.0
    %907 = vmatpush1.msra.mxu0 0.0
    %908 = vmatprep.subr.mxu0 0.0
    %909 = vmatpush1.msra.mxu0 0.0
    %910 = vmatprep.subr.mxu0 0.0
    %911 = vmatpush1.msra.mxu0 0.0
    %912 = vmatprep.subr.mxu0 0.0
    %913 = vmatpush1.msra.mxu0 0.0
    %914 = vmatprep.subr.mxu0 0.0
    %915 = vmatpush1.msra.mxu0 0.0
    %916 = vmatprep.subr.mxu0 0.0
    %917 = vmatpush1.msra.mxu0 0.0
    %918 = vmatprep.subr.mxu0 0.0
    %919 = vmatpush1.msra.mxu0 0.0
    %920 = vmatprep.subr.mxu0 0.0
    %921 = vmatpush1.msra.mxu0 0.0
    %922 = vmatprep.mubr.f32.mxu0 0.0
    %923 = vmatmul.mubr.f32.gmra.mrb[0].mxu0 %v853
    %v924 = vpop.f32.mrb[0].mxu0
    %v925 = vadd.f32 0.0, %v924
    %v926 = vpop.f32.mrb[0].mxu0
    %927 = vmatprep.mubr.f32.mxu0 0.0
    %928 = vmatmul.mubr.f32.gmra.mrb[0].mxu0 %v856
    %v929 = vpop.f32.mrb[0].mxu0
    %v930 = vadd.f32 0.0, %v929
    %v931 = vpop.f32.mrb[0].mxu0
    %932 = vdwg.mxu0
    %v933 = vadd.f32 %v732, %v925
    %v934 = vadd.f32 %v737, %v930
    %vm935 = vcmp.ge.s32.totalorder %v346, 24
    %vm936 = vcmp.lt.s32.totalorder %v346, 32
    %vm937 = vmand %vm935, %vm936
    %v938 = vsel %vm937, 1, 0
    %vm939 = vcmp.eq.s32.totalorder %v938, 1
    %v940 = vsel %vm939, %v167, 0.0
    %v941 = vsel %vm939, %v172, 0.0
    %v943 = vsel %vm46, %v940, 0
    %v946 = vsel %vm46, %v941, 0
    %948 = vmatprep.subr.mxu0 0.0
    %949 = vmatpush1.xpose.msra.mxu0 %v361
    %950 = vmatprep.subr.mxu0 0.0
    %951 = vmatpush1.xpose.msra.mxu0 %v364
    %952 = vmatprep.subr.mxu0 0.0
    %953 = vmatpush1.xpose.msra.mxu0 0.0
    %954 = vmatprep.subr.mxu0 0.0
    %955 = vmatpush1.xpose.msra.mxu0 0.0
    %956 = vmatprep.subr.mxu0 0.0
    %957 = vmatpush1.xpose.msra.mxu0 0.0
    %958 = vmatprep.subr.mxu0 0.0
    %959 = vmatpush1.xpose.msra.mxu0 0.0
    %960 = vmatprep.subr.mxu0 0.0
    %961 = vmatpush1.xpose.msra.mxu0 0.0
    %962 = vmatprep.subr.mxu0 0.0
    %963 = vmatpush1.xpose.msra.mxu0 0.0
    %964 = vmatprep.subr.mxu0 0.0
    %965 = vmatpush1.xpose.msra.mxu0 0.0
    %966 = vmatprep.subr.mxu0 0.0
    %967 = vmatpush1.xpose.msra.mxu0 0.0
    %968 = vmatprep.subr.mxu0 0.0
    %969 = vmatpush1.xpose.msra.mxu0 0.0
    %970 = vmatprep.subr.mxu0 0.0
    %971 = vmatpush1.xpose.msra.mxu0 0.0
    %972 = vmatprep.subr.mxu0 0.0
    %973 = vmatpush1.xpose.msra.mxu0 0.0
    %974 = vmatprep.subr.mxu0 0.0
    %975 = vmatpush1.xpose.msra.mxu0 0.0
    %976 = vmatprep.subr.mxu0 0.0
    %977 = vmatpush1.xpose.msra.mxu0 0.0
    %978 = vmatprep.subr.mxu0 0.0
    %979 = vmatpush1.xpose.msra.mxu0 0.0
    %980 = vmatprep.subr.mxu0 0.0
    %981 = vmatpush1.xpose.msra.mxu0 0.0
    %982 = vmatprep.subr.mxu0 0.0
    %983 = vmatpush1.xpose.msra.mxu0 0.0
    %984 = vmatprep.subr.mxu0 0.0
    %985 = vmatpush1.xpose.msra.mxu0 0.0
    %986 = vmatprep.subr.mxu0 0.0
    %987 = vmatpush1.xpose.msra.mxu0 0.0
    %988 = vmatprep.subr.mxu0 0.0
    %989 = vmatpush1.xpose.msra.mxu0 0.0
    %990 = vmatprep.subr.mxu0 0.0
    %991 = vmatpush1.xpose.msra.mxu0 0.0
    %992 = vmatprep.subr.mxu0 0.0
    %993 = vmatpush1.xpose.msra.mxu0 0.0
    %994 = vmatprep.subr.mxu0 0.0
    %995 = vmatpush1.xpose.msra.mxu0 0.0
    %996 = vmatprep.subr.mxu0 0.0
    %997 = vmatpush1.xpose.msra.mxu0 0.0
    %998 = vmatprep.subr.mxu0 0.0
    %999 = vmatpush1.xpose.msra.mxu0 0.0
    %1000 = vmatprep.subr.mxu0 0.0
    %1001 = vmatpush1.xpose.msra.mxu0 0.0
    %1002 = vmatprep.subr.mxu0 0.0
    %1003 = vmatpush1.xpose.msra.mxu0 0.0
    %1004 = vmatprep.subr.mxu0 0.0
    %1005 = vmatpush1.xpose.msra.mxu0 0.0
    %1006 = vmatprep.subr.mxu0 0.0
    %1007 = vmatpush1.xpose.msra.mxu0 0.0
    %1008 = vmatprep.subr.mxu0 0.0
    %1009 = vmatpush1.xpose.msra.mxu0 0.0
    %1010 = vmatprep.subr.mxu0 0.0
    %1011 = vmatpush1.xpose.msra.mxu0 0.0
    %1012 = vmatprep.mubr.f32.mxu0 0.0
    %1013 = vmatmul.mubr.f32.gmra.mrb[0].mxu0 %v943
    %v1014 = vpop.f32.mrb[0].mxu0
    %v1015 = vadd.f32 %v343, %v1014
    %v1016 = vpop.f32.mrb[0].mxu0
    %1017 = vmatprep.mubr.f32.mxu0 0.0
    %1018 = vmatmul.mubr.f32.gmra.mrb[0].mxu0 %v946
    %v1019 = vpop.f32.mrb[0].mxu0
    %v1020 = vadd.f32 %v344, %v1019
    %v1021 = vpop.f32.mrb[0].mxu0
    %1022 = vdwg.mxu0
    %v1023 = vsel %vm441, %v1015, -inf
    %1024 = vmax.xlane.f32.xlu0 %v1023
    %v1025 = vpop.xlane.xlu0 %1024
    %v1026 = vsel %vm441, %v1020, -inf
    %1027 = vmax.xlane.f32.xlu0 %v1026
    %v1028 = vpop.xlane.xlu0 %1027
    %v1029 = vsub.f32 %v1015, %v1025
    %v1030 = vsub.f32 %v1020, %v1028
    %v1031 = vmul.f32 %v1029, 1.442695
    %v1032 = vpow.pop %v1031
    %v1033 = vmul.f32 %v1030, 1.442695
    %v1034 = vpow.pop %v1033
    %v1035 = vsel %vm441, %v1032, 0.0
    %1036 = vadd.xlane.f32.xlu0 %v1035
    %v1037 = vpop.xlane.xlu0 %1036
    %v1038 = vsel %vm441, %v1034, 0.0
    %1039 = vadd.xlane.f32.xlu0 %v1038
    %v1040 = vpop.xlane.xlu0 %1039
    %v1041 = vrcp.pop %v1037
    %v1042 = vmul.f32 %v1032, %v1041
    %v1043 = vrcp.pop %v1040
    %v1044 = vmul.f32 %v1034, %v1043
    %v1045 = vsel %vm939, %v335, 0.0
    %v1046 = vsel %vm939, %v340, 0.0
    %v1048 = vsel %vm441, %v1042, 0
    %v1051 = vsel %vm441, %v1044, 0
    %1053 = vmatprep.subr.mxu0 0.0
    %1054 = vmatpush1.msra.mxu0 %v1045
    %1055 = vmatprep.subr.mxu0 0.0
    %1056 = vmatpush1.msra.mxu0 %v1046
    %1057 = vmatprep.subr.mxu0 0.0
    %1058 = vmatpush1.msra.mxu0 0.0
    %1059 = vmatprep.subr.mxu0 0.0
    %1060 = vmatpush1.msra.mxu0 0.0
    %1061 = vmatprep.subr.mxu0 0.0
    %1062 = vmatpush1.msra.mxu0 0.0
    %1063 = vmatprep.subr.mxu0 0.0
    %1064 = vmatpush1.msra.mxu0 0.0
    %1065 = vmatprep.subr.mxu0 0.0
    %1066 = vmatpush1.msra.mxu0 0.0
    %1067 = vmatprep.subr.mxu0 0.0
    %1068 = vmatpush1.msra.mxu0 0.0
    %1069 = vmatprep.subr.mxu0 0.0
    %1070 = vmatpush1.msra.mxu0 0.0
    %1071 = vmatprep.subr.mxu0 0.0
    %1072 = vmatpush1.msra.mxu0 0.0
    %1073 = vmatprep.subr.mxu0 0.0
    %1074 = vmatpush1.msra.mxu0 0.0
    %1075 = vmatprep.subr.mxu0 0.0
    %1076 = vmatpush1.msra.mxu0 0.0
    %1077 = vmatprep.subr.mxu0 0.0
    %1078 = vmatpush1.msra.mxu0 0.0
    %1079 = vmatprep.subr.mxu0 0.0
    %1080 = vmatpush1.msra.mxu0 0.0
    %1081 = vmatprep.subr.mxu0 0.0
    %1082 = vmatpush1.msra.mxu0 0.0
    %1083 = vmatprep.subr.mxu0 0.0
    %1084 = vmatpush1.msra.mxu0 0.0
    %1085 = vmatprep.subr.mxu0 0.0
    %1086 = vmatpush1.msra.mxu0 0.0
    %1087 = vmatprep.subr.mxu0 0.0
    %1088 = vmatpush1.msra.mxu0 0.0
    %1089 = vmatprep.subr.mxu0 0.0
    %1090 = vmatpush1.msra.mxu0 0.0
    %1091 = vmatprep.subr.mxu0 0.0
    %1092 = vmatpush1.msra.mxu0 0.0
    %1093 = vmatprep.subr.mxu0 0.0
    %1094 = vmatpush1.msra.mxu0 0.0
    %1095 = vmatprep.subr.mxu0 0.0
    %1096 = vmatpush1.msra.mxu0 0.0
    %1097 = vmatprep.subr.mxu0 0.0
    %1098 = vmatpush1.msra.mxu0 0.0
    %1099 = vmatprep.subr.mxu0 0.0
    %1100 = vmatpush1.msra.mxu0 0.0
    %1101 = vmatprep.subr.mxu0 0.0
    %1102 = vmatpush1.msra.mxu0 0.0
    %1103 = vmatprep.subr.mxu0 0.0
    %1104 = vmatpush1.msra.mxu0 0.0
    %1105 = vmatprep.subr.mxu0 0.0
    %1106 = vmatpush1.msra.mxu0 0.0
    %1107 = vmatprep.subr.mxu0 0.0
    %1108 = vmatpush1.msra.mxu0 0.0
    %1109 = vmatprep.subr.mxu0 0.0
    %1110 = vmatpush1.msra.mxu0 0.0
    %1111 = vmatprep.subr.mxu0 0.0
    %1112 = vmatpush1.msra.mxu0 0.0
    %1113 = vmatprep.subr.mxu0 0.0
    %1114 = vmatpush1.msra.mxu0 0.0
    %1115 = vmatprep.subr.mxu0 0.0
    %1116 = vmatpush1.msra.mxu0 0.0
    %1117 = vmatprep.mubr.f32.mxu0 0.0
    %1118 = vmatmul.mubr.f32.gmra.mrb[0].mxu0 %v1048
    %v1119 = vpop.f32.mrb[0].mxu0
    %v1120 = vadd.f32 0.0, %v1119
    %v1121 = vpop.f32.mrb[0].mxu0
    %1122 = vmatprep.mubr.f32.mxu0 0.0
    %1123 = vmatmul.mubr.f32.gmra.mrb[0].mxu0 %v1051
    %v1124 = vpop.f32.mrb[0].mxu0
    %v1125 = vadd.f32 0.0, %v1124
    %v1126 = vpop.f32.mrb[0].mxu0
    %1127 = vdwg.mxu0
    %v1128 = vadd.f32 %v933, %v1120
    %v1129 = vadd.f32 %v934, %v1125
    %v1130 = vadd.f32 %v1128, %v84
    %v1131 = vadd.f32 %v1129, %v85
    %v1132 = vsel %vm46, %v1130, 0.0
    %1133 = vadd.xlane.f32.xlu0 %v1132
    %v1134 = vpop.xlane.xlu0 %1133
    %v1135 = vsel %vm46, %v1131, 0.0
    %1136 = vadd.xlane.f32.xlu0 %v1135
    %v1137 = vpop.xlane.xlu0 %1136
    %v1138 = vmul.f32 %v1134, %v53
    %v1139 = vmul.f32 %v1137, %v53
    %v1140 = vsub.f32 %v1130, %v1138
    %v1141 = vsub.f32 %v1131, %v1139
    %v1142 = vmul.f32 %v1140, %v1140
    %v1143 = vmul.f32 %v1141, %v1141
    %v1144 = vsel %vm46, %v1142, 0.0
    %1145 = vadd.xlane.f32.xlu0 %v1144
    %v1146 = vpop.xlane.xlu0 %1145
    %v1147 = vsel %vm46, %v1143, 0.0
    %1148 = vadd.xlane.f32.xlu0 %v1147
    %v1149 = vpop.xlane.xlu0 %1148
    %v1150 = vmul.f32 %v1146, %v53
    %v1151 = vmul.f32 %v1149, %v53
    %v1152 = vadd.f32 %v1150, 1e-12
    %v1153 = vadd.f32 %v1151, 1e-12
    %v1154 = vrsqrt.pop %v1152
    %v1155 = vrsqrt.pop %v1153
    %v1156 = vmul.f32 %v1140, %v1154
    %v1157 = vmul.f32 %v1141, %v1155
    %v1158 = vlaneseq
    %v1159 = vshrl.u32 %v1158, 7
    %v1160 = vsub.s32 0, %v1159
    %v1161 = vrot.slane %v35, %v1160
    %v1162 = vmul.f32 %v1156, %v1161
    %v1163 = vmul.f32 %v1157, %v1161
    %v1164 = vlaneseq
    %v1165 = vshrl.u32 %v1164, 7
    %v1166 = vsub.s32 0, %v1165
    %v1167 = vrot.slane %v36, %v1166
    %v1168 = vadd.f32 %v1162, %v1167
    %v1169 = vadd.f32 %v1163, %v1167
    %v1170 = vld [vmem:[%s6] sm:$0xff]
    %v1171 = vld [vmem:[%s6 + $0x8] sm:$0xff]
    %v1172 = vld [vmem:[%s6 + $0x10] sm:$0xff]
    %v1173 = vld [vmem:[%s6 + $0x18] sm:$0xff]
    %v1174 = vld [vmem:[%s4] sm:$0x1]
    %v1176 = vlaneseq
    %v1177 = vshrl.u32 %v1176, 7
    %v1178 = vsub.s32 0, %v1177
    %v1179 = vrot.slane %v1174, %v1178
    %v1182 = vsel %vm46, %v1168, 0
    %v1185 = vsel %vm46, %v1169, 0
    %1187 = vmatprep.subr.mxu0 0.0
    %1188 = vmatpush1.msra.mxu0 %v1170
    %1189 = vmatprep.subr.mxu0 0.0
    %1190 = vmatpush1.msra.mxu0 %v1171
    %1191 = vmatprep.subr.mxu0 0.0
    %1192 = vmatpush1.msra.mxu0 %v1172
    %1193 = vmatprep.subr.mxu0 0.0
    %1194 = vmatpush1.msra.mxu0 %v1173
    %1195 = vmatprep.subr.mxu0 0.0
    %1196 = vmatpush1.msra.mxu0 0.0
    %1197 = vmatprep.subr.mxu0 0.0
    %1198 = vmatpush1.msra.mxu0 0.0
    %1199 = vmatprep.subr.mxu0 0.0
    %1200 = vmatpush1.msra.mxu0 0.0
    %1201 = vmatprep.subr.mxu0 0.0
    %1202 = vmatpush1.msra.mxu0 0.0
    %1203 = vmatprep.subr.mxu0 0.0
    %1204 = vmatpush1.msra.mxu0 0.0
    %1205 = vmatprep.subr.mxu0 0.0
    %1206 = vmatpush1.msra.mxu0 0.0
    %1207 = vmatprep.subr.mxu0 0.0
    %1208 = vmatpush1.msra.mxu0 0.0
    %1209 = vmatprep.subr.mxu0 0.0
    %1210 = vmatpush1.msra.mxu0 0.0
    %1211 = vmatprep.subr.mxu0 0.0
    %1212 = vmatpush1.msra.mxu0 0.0
    %1213 = vmatprep.subr.mxu0 0.0
    %1214 = vmatpush1.msra.mxu0 0.0
    %1215 = vmatprep.subr.mxu0 0.0
    %1216 = vmatpush1.msra.mxu0 0.0
    %1217 = vmatprep.subr.mxu0 0.0
    %1218 = vmatpush1.msra.mxu0 0.0
    %1219 = vmatprep.subr.mxu0 0.0
    %1220 = vmatpush1.msra.mxu0 0.0
    %1221 = vmatprep.subr.mxu0 0.0
    %1222 = vmatpush1.msra.mxu0 0.0
    %1223 = vmatprep.subr.mxu0 0.0
    %1224 = vmatpush1.msra.mxu0 0.0
    %1225 = vmatprep.subr.mxu0 0.0
    %1226 = vmatpush1.msra.mxu0 0.0
    %1227 = vmatprep.subr.mxu0 0.0
    %1228 = vmatpush1.msra.mxu0 0.0
    %1229 = vmatprep.subr.mxu0 0.0
    %1230 = vmatpush1.msra.mxu0 0.0
    %1231 = vmatprep.subr.mxu0 0.0
    %1232 = vmatpush1.msra.mxu0 0.0
    %1233 = vmatprep.subr.mxu0 0.0
    %1234 = vmatpush1.msra.mxu0 0.0
    %1235 = vmatprep.subr.mxu0 0.0
    %1236 = vmatpush1.msra.mxu0 0.0
    %1237 = vmatprep.subr.mxu0 0.0
    %1238 = vmatpush1.msra.mxu0 0.0
    %1239 = vmatprep.subr.mxu0 0.0
    %1240 = vmatpush1.msra.mxu0 0.0
    %1241 = vmatprep.subr.mxu0 0.0
    %1242 = vmatpush1.msra.mxu0 0.0
    %1243 = vmatprep.subr.mxu0 0.0
    %1244 = vmatpush1.msra.mxu0 0.0
    %1245 = vmatprep.subr.mxu0 0.0
    %1246 = vmatpush1.msra.mxu0 0.0
    %1247 = vmatprep.subr.mxu0 0.0
    %1248 = vmatpush1.msra.mxu0 0.0
    %1249 = vmatprep.subr.mxu0 0.0
    %1250 = vmatpush1.msra.mxu0 0.0
    %1251 = vmatprep.mubr.f32.mxu0 0.0
    %1252 = vmatmul.mubr.f32.gmra.mrb[0].mxu0 %v1182
    %v1253 = vpop.f32.mrb[0].mxu0
    %v1254 = vadd.f32 %v1179, %v1253
    %v1255 = vpop.f32.mrb[0].mxu0
    %1256 = vmatprep.mubr.f32.mxu0 0.0
    %1257 = vmatmul.mubr.f32.gmra.mrb[0].mxu0 %v1185
    %v1258 = vpop.f32.mrb[0].mxu0
    %v1259 = vadd.f32 %v1179, %v1258
    %v1260 = vpop.f32.mrb[0].mxu0
    %1261 = vdwg.mxu0
    %v1262 = vmax.f32 %v1254, 0.0
    %v1263 = vmax.f32 %v1259, 0.0
    %v1264 = vld [vmem:[%s7] sm:$0xff]
    %v1265 = vld [vmem:[%s7 + $0x8] sm:$0xff]
    %v1266 = vld [vmem:[%s7 + $0x10] sm:$0xff]
    %v1267 = vld [vmem:[%s7 + $0x18] sm:$0xff]
    %v1268 = vld [vmem:[%s7 + $0x20] sm:$0xff]
    %v1269 = vld [vmem:[%s7 + $0x28] sm:$0xff]
    %v1270 = vld [vmem:[%s7 + $0x30] sm:$0xff]
    %v1271 = vld [vmem:[%s7 + $0x38] sm:$0xff]
    %v1272 = vlaneseq
    %v1273 = vshrl.u32 %v1272, 7
    %v1274 = vsub.s32 0, %v1273
    %v1275 = vrot.slane %v37, %v1274
    %vm1276 = vcmask 523264
    %v1278 = vsel %vm1276, %v1262, 0
    %v1281 = vsel %vm1276, %v1263, 0
    %1283 = vmatprep.subr.mxu0 0.0
    %1284 = vmatpush1.msra.mxu0 %v1264
    %1285 = vmatprep.subr.mxu0 0.0
    %1286 = vmatpush1.msra.mxu0 %v1265
    %1287 = vmatprep.subr.mxu0 0.0
    %1288 = vmatpush1.msra.mxu0 %v1266
    %1289 = vmatprep.subr.mxu0 0.0
    %1290 = vmatpush1.msra.mxu0 %v1267
    %1291 = vmatprep.subr.mxu0 0.0
    %1292 = vmatpush1.msra.mxu0 %v1268
    %1293 = vmatprep.subr.mxu0 0.0
    %1294 = vmatpush1.msra.mxu0 %v1269
    %1295 = vmatprep.subr.mxu0 0.0
    %1296 = vmatpush1.msra.mxu0 %v1270
    %1297 = vmatprep.subr.mxu0 0.0
    %1298 = vmatpush1.msra.mxu0 %v1271
    %1299 = vmatprep.subr.mxu0 0.0
    %1300 = vmatpush1.msra.mxu0 0.0
    %1301 = vmatprep.subr.mxu0 0.0
    %1302 = vmatpush1.msra.mxu0 0.0
    %1303 = vmatprep.subr.mxu0 0.0
    %1304 = vmatpush1.msra.mxu0 0.0
    %1305 = vmatprep.subr.mxu0 0.0
    %1306 = vmatpush1.msra.mxu0 0.0
    %1307 = vmatprep.subr.mxu0 0.0
    %1308 = vmatpush1.msra.mxu0 0.0
    %1309 = vmatprep.subr.mxu0 0.0
    %1310 = vmatpush1.msra.mxu0 0.0
    %1311 = vmatprep.subr.mxu0 0.0
    %1312 = vmatpush1.msra.mxu0 0.0
    %1313 = vmatprep.subr.mxu0 0.0
    %1314 = vmatpush1.msra.mxu0 0.0
    %1315 = vmatprep.subr.mxu0 0.0
    %1316 = vmatpush1.msra.mxu0 0.0
    %1317 = vmatprep.subr.mxu0 0.0
    %1318 = vmatpush1.msra.mxu0 0.0
    %1319 = vmatprep.subr.mxu0 0.0
    %1320 = vmatpush1.msra.mxu0 0.0
    %1321 = vmatprep.subr.mxu0 0.0
    %1322 = vmatpush1.msra.mxu0 0.0
    %1323 = vmatprep.subr.mxu0 0.0
    %1324 = vmatpush1.msra.mxu0 0.0
    %1325 = vmatprep.subr.mxu0 0.0
    %1326 = vmatpush1.msra.mxu0 0.0
    %1327 = vmatprep.subr.mxu0 0.0
    %1328 = vmatpush1.msra.mxu0 0.0
    %1329 = vmatprep.subr.mxu0 0.0
    %1330 = vmatpush1.msra.mxu0 0.0
    %1331 = vmatprep.subr.mxu0 0.0
    %1332 = vmatpush1.msra.mxu0 0.0
    %1333 = vmatprep.subr.mxu0 0.0
    %1334 = vmatpush1.msra.mxu0 0.0
    %1335 = vmatprep.subr.mxu0 0.0
    %1336 = vmatpush1.msra.mxu0 0.0
    %1337 = vmatprep.subr.mxu0 0.0
    %1338 = vmatpush1.msra.mxu0 0.0
    %1339 = vmatprep.subr.mxu0 0.0
    %1340 = vmatpush1.msra.mxu0 0.0
    %1341 = vmatprep.subr.mxu0 0.0
    %1342 = vmatpush1.msra.mxu0 0.0
    %1343 = vmatprep.subr.mxu0 0.0
    %1344 = vmatpush1.msra.mxu0 0.0
    %1345 = vmatprep.subr.mxu0 0.0
    %1346 = vmatpush1.msra.mxu0 0.0
    %1347 = vmatprep.mubr.f32.mxu0 0.0
    %1348 = vmatmul.mubr.f32.gmra.mrb[0].mxu0 %v1278
    %v1349 = vpop.f32.mrb[0].mxu0
    %v1350 = vadd.f32 %v1275, %v1349
    %v1351 = vpop.f32.mrb[0].mxu0
    %1352 = vmatprep.mubr.f32.mxu0 0.0
    %1353 = vmatmul.mubr.f32.gmra.mrb[0].mxu0 %v1281
    %v1354 = vpop.f32.mrb[0].mxu0
    %v1355 = vadd.f32 %v1275, %v1354
    %v1356 = vpop.f32.mrb[0].mxu0
    %1357 = vdwg.mxu0
    %v1358 = vadd.f32 %v1350, %v1168
    %v1359 = vadd.f32 %v1355, %v1169
    %v1360 = vsel %vm46, %v1358, 0.0
    %1361 = vadd.xlane.f32.xlu0 %v1360
    %v1362 = vpop.xlane.xlu0 %1361
    %v1363 = vsel %vm46, %v1359, 0.0
    %1364 = vadd.xlane.f32.xlu0 %v1363
    %v1365 = vpop.xlane.xlu0 %1364
    %v1366 = vmul.f32 %v1362, %v53
    %v1367 = vmul.f32 %v1365, %v53
    %v1368 = vsub.f32 %v1358, %v1366
    %v1369 = vsub.f32 %v1359, %v1367
    %v1370 = vmul.f32 %v1368, %v1368
    %v1371 = vmul.f32 %v1369, %v1369
    %v1372 = vsel %vm46, %v1370, 0.0
    %1373 = vadd.xlane.f32.xlu0 %v1372
    %v1374 = vpop.xlane.xlu0 %1373
    %v1375 = vsel %vm46, %v1371, 0.0
    %1376 = vadd.xlane.f32.xlu0 %v1375
    %v1377 = vpop.xlane.xlu0 %1376
    %v1378 = vmul.f32 %v1374, %v53
    %v1379 = vmul.f32 %v1377, %v53
    %v1380 = vadd.f32 %v1378, 1e-12
    %v1381 = vadd.f32 %v1379, 1e-12
    %v1382 = vrsqrt.pop %v1380
    %v1383 = vrsqrt.pop %v1381
    %v1384 = vmul.f32 %v1368, %v1382
    %v1385 = vmul.f32 %v1369, %v1383
    %v1386 = vlaneseq
    %v1387 = vshrl.u32 %v1386, 7
    %v1388 = vsub.s32 0, %v1387
    %v1389 = vrot.slane %v38, %v1388
    %v1390 = vmul.f32 %v1384, %v1389
    %v1391 = vmul.f32 %v1385, %v1389
    %v1392 = vlaneseq
    %v1393 = vshrl.u32 %v1392, 7
    %v1394 = vsub.s32 0, %v1393
    %v1395 = vrot.slane %v39, %v1394
    %v1396 = vadd.f32 %v1390, %v1395
    %v1397 = vadd.f32 %v1391, %v1395
    %1398 = vst.msk [vmem:[#allocation2] sm:$0xff] %vm46, %v1396
    %1399 = vst.msk [vmem:[#allocation2 + $0x8] sm:$0xff] %vm46, %v1397
    // Predicated region
    $region34: #{protrans_forward.1} parent=1 // pred_check
      _
    $region35: #{protrans_forward.1} parent=1 // pred_check_branch
      %1401 = sbr.rel (0) target = $region37
    $region36: #{protrans_forward.1} parent=1 // pred_region
      %s1403 = ssub.s32 256, 256
      %1404 = vsyncadd [#allocation3], %s1403
      %s1405 = sshll.u32 [#allocation2], 4
      %s1406 = int_to_ptr.vmem [resolvable:$true] %s1405
      %1411 = dma.vmem_to_hbm [thread:$0]  %s1406, 256, %s8, [#allocation3], 128, 128, 8
    $region37: #{protrans_forward.1} parent=1 // pred_fallthru
      _
    // Predicated region
    $region38: #{protrans_forward.1} parent=1 // pred_check
      _
    $region39: #{protrans_forward.1} parent=1 // pred_check_branch
      %1413 = sbr.rel (0) target = $region41
    $region40: #{protrans_forward.1} parent=1 // pred_region
      %1414 = dma.done [#allocation3], 256
    $region41: #{protrans_forward.1} parent=1 // pred_fallthru
      _
    %1415 = vsyncpa [#allocation3], 1

</llo_original>
